<compile_context>
chip_gen: v7x
topology: tpu7x:2x2x1
jax: 0.10.0
libtpu: 0.0.40
codegen_flags: <defaults>
</compile_context>

<pallas_src>
import functools

import jax
import jax.numpy as jnp
import numpy as np
from jax.experimental import pallas as pl
from jax.experimental.pallas import tpu as pltpu


def _linformer_kernel(x_ref, wq_ref, wk_ref, wv_ref, et_ref, w0t_ref, o_ref,
                      ket_ref, veh_ref, cat_ref, *, num_heads, dim_head, q_tile):
    """Grid = (B, nT): batch b outer ("parallel"), query tile t inner ("arbitrary").

    x_ref   : (1, T, dim)   full sequence for this batch (resident across t)
    wq/wk/wv: (dim, dim)    head-major column layout (col = h*dh + d), resident;
                            softmax scale is pre-folded into wq
    et_ref  : (kp, T)       E^T (Linformer projection, transposed), resident
    w0t_ref : (dim, dim)    W0^T, resident
    o_ref   : (1, tT, dim)  output tile
    ket_ref : (H, dh, kp)   per-head (E^T K)^T, filled once per batch at t == 0
    veh_ref : (H, kp, dh)   per-head  E^T V,    filled once per batch at t == 0
    cat_ref : (tT, dim)     head-concatenated per-tile output buffer

    NOTE: correctness of the t == 0 compression relies on the t axis iterating
    sequentially (innermost, "arbitrary") for a fixed b and on scratch refs
    persisting across grid steps on the same core.  Do not mark the t axis
    "parallel" or reorder the grid axes.
    """
    t = pl.program_id(1)
    cdt = x_ref.dtype  # compute dtype for MXU operands (bf16-friendly)

    # ---- once per batch row: fused Linformer compression ---------------------
    @pl.when(t == 0)
    def _():
        xf = x_ref[0]                                                 # (T, dim)
        # E^T (X W) == (E^T X) W: one (kp,T)x(T,dim) GEMM + two (kp,dim)x(dim,dim)
        # GEMMs; no (T, dim) K/V temporaries.
        xe = jnp.dot(et_ref[...], xf,
                     preferred_element_type=jnp.float32).astype(cdt)  # (kp, dim)
        ke = jnp.dot(xe, wk_ref[...],
                     preferred_element_type=jnp.float32).astype(cdt)  # (kp, dim)
        ve = jnp.dot(xe, wv_ref[...],
                     preferred_element_type=jnp.float32).astype(cdt)  # (kp, dim)
        # Per-head split + K transpose done ONCE per batch row so lane-axis
        # relayouts stay off the per-tile hot path.
        for h in range(num_heads):
            sl = slice(h * dim_head, (h + 1) * dim_head)
            ket_ref[h] = ke[:, sl].T                                  # (dh, kp)
            veh_ref[h] = ve[:, sl]                                    # (kp, dh)

    # ---- per query tile -------------------------------------------------------
    t0 = pl.multiple_of(t * q_tile, q_tile)
    xq = x_ref[0, pl.ds(t0, q_tile), :]                               # (tT, dim)
    # softmax scale already folded into wq host-side -> no in-kernel scaling.
    q_all = jnp.dot(xq, wq_ref[...],
                    preferred_element_type=jnp.float32).astype(cdt)   # (tT, dim)

    # TODO(synk): when dim_head < 128, grouping heads into >=128-wide
    # block-diagonal GEMMs would raise MXU utilization on the score / attn@V
    # matmuls; kept per-head (statically unrolled) here for simplicity.
    for h in range(num_heads):
        sl = slice(h * dim_head, (h + 1) * dim_head)
        qh = q_all[:, sl]                                             # (tT, dh)
        s = jnp.dot(qh, ket_ref[h],
                    preferred_element_type=jnp.float32)               # (tT, kp)
        s = s - jnp.max(s, axis=-1, keepdims=True)
        p = jnp.exp(s)
        denom = jnp.sum(p, axis=-1, keepdims=True)
        r = pl.reciprocal(denom, approx=True)        # EUP slot (free-ish)
        r = r * (2.0 - denom * r)                    # one Newton step -> ~f32 exact
        attn = (p * r).astype(cdt)                                    # (tT, kp)
        # 'b h t d -> b t (h d)': write head h's output at its column offset.
        cat_ref[:, sl] = jnp.dot(attn, veh_ref[h],
                                 preferred_element_type=jnp.float32).astype(cdt)

    # Single full-K GEMM against W0^T on the head-concatenated tile.
    o_ref[0] = jnp.dot(cat_ref[...], w0t_ref[...],
                       preferred_element_type=jnp.float32).astype(o_ref.dtype)


def _pick_query_tile(T, max_tile=512):
    """MXU/layout-aware query tile: largest divisor of T <= max_tile, preferring
    multiples of 256 (v6e/v7x MXU), then 128 (v5e MXU), then 16 (bf16 sublane
    packing), then 8 (f32 sublanes)."""
    if T <= max_tile:
        return T
    for step in (256, 128, 16, 8):
        best = 0
        for tile in range(step, max_tile + 1, step):
            if T % tile == 0:
                best = tile
        if best:
            return best
    # TODO(synk): awkward T with no multiple-of-8 divisor <= max_tile falls back
    # to a full-sequence tile; a pl.cdiv grid + masked tail would be needed to
    # tile such shapes without OOB query slices.
    return T


def linformer_attention_pallas(x, w_qkv, w0, E, num_heads, *,
                               compute_dtype=None, max_query_tile=512):
    """x: (B, T, dim); w_qkv: (3*dim, dim) [torch Linear layout]; w0: (dim, dim);
    E: (T, kp). Returns (B, T, dim).

    compute_dtype: optionally cast operands (e.g. jnp.bfloat16) for ~2x MXU
    throughput + 2x memory headroom; accumulation is always f32.
    """
    B, T, dim = x.shape
    assert dim % num_heads == 0, "dim must be divisible by num_heads"
    dh = dim // num_heads
    kp = E.shape[1]
    scale = dh ** -0.5  # TODO(synk): module's self.dim is undefined; use dim_head**-0.5
    if compute_dtype is not None:
        x = x.astype(compute_dtype)
    dtype = x.dtype

    # qkv feature index follows rearrange 'b t (k d h)': f = k*dim + d*H + h.
    # Build full-width (dim_in, dim_out) weights with HEAD-MAJOR output columns:
    #   W[i, h*dh + d] = w_qkv[k*dim + d*H + h, i]
    # so q_all[:, h*dh:(h+1)*dh] is exactly head h's (T, dh) query block.
    def head_major_cols(w_block):                  # (dim, dim) -> (dim, dim)
        return w_block.reshape(dh, num_heads, dim).transpose(2, 1, 0).reshape(dim, dim)

    wq = (head_major_cols(w_qkv[0 * dim:1 * dim]) * scale).astype(dtype)  # scale folded in
    wk = head_major_cols(w_qkv[1 * dim:2 * dim]).astype(dtype)
    wv = head_major_cols(w_qkv[2 * dim:3 * dim]).astype(dtype)
    w0t = w0.T.astype(dtype)                       # (dim, dim)
    et = E.T.astype(dtype)                         # (kp, T)

    tT = _pick_query_tile(T, max_query_tile)
    nT = T // tT

    kernel = functools.partial(_linformer_kernel, num_heads=num_heads,
                               dim_head=dh, q_tile=tT)

    bs = jnp.dtype(dtype).itemsize
    # FLOPs after the E^T fusion.
    flops = B * (2 * kp * T * dim                 # xe = E^T x
                 + 2 * 2 * kp * dim * dim         # ke, ve
                 + 2 * T * dim * dim              # Q projection
                 + 2 * 2 * T * kp * dim           # scores + attn @ V (all heads)
                 + 2 * T * dim * dim)             # W0
    cost = pl.CostEstimate(
        flops=int(flops),
        transcendentals=int(B * num_heads * T * kp),
        bytes_accessed=int(bs * (2 * B * T * dim   # x read once + out write once
                                 + 4 * dim * dim   # Wq/Wk/Wv/W0 (fetched once)
                                 + kp * T)))       # E^T (fetched once)

    # VMEM budget: Mosaic double-buffers pipeline blocks (the weight / E^T
    # blocks have constant index_maps and are never re-fetched, but we still
    # budget 2x), plus single-buffered scratch and f32 matmul temporaries.
    # TODO(synk): for very long T, hoist the per-batch compression into its own
    # kernel so x_full / E^T need not be VMEM-resident here.
    vmem_est = bs * (2 * (T * dim + 4 * dim * dim + kp * T + tT * dim)  # blocks
                     + 2 * kp * dim + tT * dim)                          # scratch
    vmem_est += 4 * (3 * kp * dim + 2 * tT * dim + 2 * tT * kp)          # f32 temps
    vmem_limit = int(min(max(32 << 20, (vmem_est * 5) // 4), 128 << 20))

    return pl.pallas_call(
        kernel,
        out_shape=jax.ShapeDtypeStruct((B, T, dim), dtype),
        grid_spec=pltpu.PrefetchScalarGridSpec(
            num_scalar_prefetch=0,
            grid=(B, nT),
            in_specs=[
                pl.BlockSpec((1, T, dim), lambda b, t: (b, 0, 0)),    # x (full seq, resident over t)
                pl.BlockSpec((dim, dim), lambda b, t: (0, 0)),        # Wq (resident, scale folded in)
                pl.BlockSpec((dim, dim), lambda b, t: (0, 0)),        # Wk (resident)
                pl.BlockSpec((dim, dim), lambda b, t: (0, 0)),        # Wv (resident)
                pl.BlockSpec((kp, T), lambda b, t: (0, 0)),           # E^T (resident)
                pl.BlockSpec((dim, dim), lambda b, t: (0, 0)),        # W0^T (resident)
            ],
            out_specs=pl.BlockSpec((1, tT, dim), lambda b, t: (b, t, 0)),
            scratch_shapes=[pltpu.VMEM((num_heads, dh, kp), dtype),   # per-head (E^T K)^T
                            pltpu.VMEM((num_heads, kp, dh), dtype),   # per-head  E^T V
                            pltpu.VMEM((tT, dim), dtype)],            # head-concat tile
        ),
        compiler_params=pltpu.CompilerParams(
            # batch axis "parallel" -> megacore / v7x 2-TC sharding (needs B>=2);
            # t axis MUST stay "arbitrary" (sequential) for t==0 scratch reuse.
            dimension_semantics=("parallel", "arbitrary"),
            vmem_limit_bytes=vmem_limit),
        cost_estimate=cost,
    )(x, wq, wk, wv, et, w0t)


def linformer_attention_ref(x, w_qkv, w0, E, num_heads):
    """Pure-JAX mirror of the PyTorch forward (for verification)."""
    B, T, dim = x.shape
    dh = dim // num_heads
    qkv = x @ w_qkv.T                                            # (B, T, 3*dim)
    qkv = qkv.reshape(B, T, 3, dh, num_heads)                    # 'b t (k d h)'
    qkv = jnp.transpose(qkv, (2, 0, 4, 1, 3))                    # (3, B, H, T, dh)
    q, k, v = qkv[0], qkv[1], qkv[2]
    v = jnp.einsum('bhjd,jk->bhkd', v, E)
    k = jnp.einsum('bhjd,jk->bhkd', k, E)
    scale = dh ** -0.5
    scores = jnp.einsum('bhid,bhjd->bhij', q, k) * scale
    attn = jax.nn.softmax(scores, axis=-1)
    out = jnp.einsum('bhij,bhjd->bhid', attn, v)                 # (B, H, T, dh)
    out = jnp.transpose(out, (0, 2, 1, 3)).reshape(B, T, dim)    # 'b h t d -> b t (h d)'
    return out @ w0.T


if __name__ == "__main__":
    # ---- test 1: small f32, single query tile --------------------------------
    B, T, dim = 2, 16, 32
    num_heads = 4
    kp = 8                      # Linformer projected sequence length
    key = jax.random.PRNGKey(0)
    keys = jax.random.split(key, 8)

    x = jax.random.normal(keys[0], (B, T, dim), dtype=jnp.float32)
    w_qkv = jax.random.normal(keys[1], (3 * dim, dim), dtype=jnp.float32) * 0.1
    w0 = jax.random.normal(keys[2], (dim, dim), dtype=jnp.float32) * 0.1
    E = jax.random.normal(keys[3], (T, kp), dtype=jnp.float32)

    out = jax.block_until_ready(linformer_attention_pallas(x, w_qkv, w0, E, num_heads))
    ref = linformer_attention_ref(x, w_qkv, w0, E, num_heads)
    np.testing.assert_allclose(np.asarray(out), np.asarray(ref), rtol=1e-4, atol=1e-4)

    # ---- test 2: tiled query axis (nT = 2 exercises t > 0 scratch reuse), f32 -
    B2, T2, dim2, H2, kp2 = 2, 64, 128, 2, 16
    x2 = jax.random.normal(keys[4], (B2, T2, dim2), dtype=jnp.float32)
    w_qkv2 = jax.random.normal(keys[5], (3 * dim2, dim2), dtype=jnp.float32) * 0.1
    w02 = jax.random.normal(keys[6], (dim2, dim2), dtype=jnp.float32) * 0.1
    E2 = jax.random.normal(keys[7], (T2, kp2), dtype=jnp.float32)

    out2 = jax.block_until_ready(
        linformer_attention_pallas(x2, w_qkv2, w02, E2, H2, max_query_tile=32))
    ref2 = linformer_attention_ref(x2, w_qkv2, w02, E2, H2)
    np.testing.assert_allclose(np.asarray(out2), np.asarray(ref2), rtol=1e-4, atol=1e-4)

    # ---- test 3: bf16 compute path (loose tolerance smoke test) ---------------
    E3 = E2 * 0.25   # milder logits -> less softmax sensitivity to bf16 rounding
    out3 = jax.block_until_ready(
        linformer_attention_pallas(x2, w_qkv2, w02, E3, H2,
                                   compute_dtype=jnp.bfloat16, max_query_tile=32))
    ref3 = linformer_attention_ref(
        x2.astype(jnp.bfloat16).astype(jnp.float32),
        w_qkv2.astype(jnp.bfloat16).astype(jnp.float32),
        w02.astype(jnp.bfloat16).astype(jnp.float32),
        E3.astype(jnp.bfloat16).astype(jnp.float32), H2)
    np.testing.assert_allclose(np.asarray(out3, dtype=np.float32),
                               np.asarray(ref3), rtol=0.2, atol=0.2)

    print("KERNEL_OK")
</pallas_src>

<mosaic_0001>
module attributes {stable_mosaic.version = 11 : i64} {
  func.func @_linformer_kernel(%arg0: i32, %arg1: i32, %arg2: memref<1x16x32xf32, #tpu.memory_space<vmem>>, %arg3: memref<32x32xf32, #tpu.memory_space<vmem>>, %arg4: memref<32x32xf32, #tpu.memory_space<vmem>>, %arg5: memref<32x32xf32, #tpu.memory_space<vmem>>, %arg6: memref<8x16xf32, #tpu.memory_space<vmem>>, %arg7: memref<32x32xf32, #tpu.memory_space<vmem>>, %arg8: memref<1x16x32xf32, #tpu.memory_space<vmem>>, %arg9: memref<4x8x8xf32, #tpu.memory_space<vmem>>, %arg10: memref<4x8x8xf32, #tpu.memory_space<vmem>>, %arg11: memref<16x32xf32, #tpu.memory_space<vmem>>) attributes {dimension_semantics = [#tpu.dimension_semantics<parallel>, #tpu.dimension_semantics<arbitrary>], iteration_bounds = array<i64: 2, 1>, scalar_prefetch = 0 : i64, scratch_operands = 3 : i64, tpu.core_type = #tpu.core_type<tc>, window_params = [{transform_indices = @transform_0, window_bounds = array<i64: 1, 16, 32>}, {pipeline_mode = #tpu.pipeline_mode<synchronous>, transform_indices = @transform_1, window_bounds = array<i64: 32, 32>}, {pipeline_mode = #tpu.pipeline_mode<synchronous>, transform_indices = @transform_2, window_bounds = array<i64: 32, 32>}, {pipeline_mode = #tpu.pipeline_mode<synchronous>, transform_indices = @transform_3, window_bounds = array<i64: 32, 32>}, {pipeline_mode = #tpu.pipeline_mode<synchronous>, transform_indices = @transform_4, window_bounds = array<i64: 8, 16>}, {pipeline_mode = #tpu.pipeline_mode<synchronous>, transform_indices = @transform_5, window_bounds = array<i64: 32, 32>}, {transform_indices = @transform_6, window_bounds = array<i64: 1, 16, 32>}]} {
    %c0_i32 = arith.constant 0 : i32
    %0 = arith.cmpi eq, %arg1, %c0_i32 : i32
    %1 = arith.extui %0 : i1 to i32
    %c0_i32_0 = arith.constant 0 : i32
    %2 = arith.cmpi ne, %1, %c0_i32_0 : i32
    scf.if %2 {
      %c0_58 = arith.constant 0 : index
      %c0_59 = arith.constant 0 : index
      %c0_60 = arith.constant 0 : index
      %104 = vector.load %arg2[%c0_58, %c0_59, %c0_60] : memref<1x16x32xf32, #tpu.memory_space<vmem>>, vector<1x16x32xf32>
      %105 = vector.shape_cast %104 : vector<1x16x32xf32> to vector<16x32xf32>
      %c0_61 = arith.constant 0 : index
      %c0_62 = arith.constant 0 : index
      %106 = vector.load %arg6[%c0_61, %c0_62] : memref<8x16xf32, #tpu.memory_space<vmem>>, vector<8x16xf32>
      %cst_63 = arith.constant dense<0.000000e+00> : vector<8x32xf32>
      %107 = tpu.matmul %106, %105, %cst_63 {dimension_numbers = #tpu.dot_dimension_numbers<[1], [0], [0], [1], [0, 0, 1, 1], [], []>} : vector<8x16xf32>, vector<16x32xf32>, vector<8x32xf32> -> vector<8x32xf32>
      %c0_64 = arith.constant 0 : index
      %c0_65 = arith.constant 0 : index
      %108 = vector.load %arg4[%c0_64, %c0_65] : memref<32x32xf32, #tpu.memory_space<vmem>>, vector<32x32xf32>
      %cst_66 = arith.constant dense<0.000000e+00> : vector<8x32xf32>
      %109 = tpu.matmul %107, %108, %cst_66 {dimension_numbers = #tpu.dot_dimension_numbers<[1], [0], [0], [1], [0, 0, 1, 1], [], []>} : vector<8x32xf32>, vector<32x32xf32>, vector<8x32xf32> -> vector<8x32xf32>
      %c0_67 = arith.constant 0 : index
      %c0_68 = arith.constant 0 : index
      %110 = vector.load %arg5[%c0_67, %c0_68] : memref<32x32xf32, #tpu.memory_space<vmem>>, vector<32x32xf32>
      %cst_69 = arith.constant dense<0.000000e+00> : vector<8x32xf32>
      %111 = tpu.matmul %107, %110, %cst_69 {dimension_numbers = #tpu.dot_dimension_numbers<[1], [0], [0], [1], [0, 0, 1, 1], [], []>} : vector<8x32xf32>, vector<32x32xf32>, vector<8x32xf32> -> vector<8x32xf32>
      %112 = vector.extract_strided_slice %109 {offsets = [0, 0], sizes = [8, 8], strides = [1, 1]} : vector<8x32xf32> to vector<8x8xf32>
      %113 = tpu.transpose %112, [1, 0] : vector<8x8xf32> -> vector<8x8xf32>
      %c0_70 = arith.constant 0 : index
      %c0_71 = arith.constant 0 : index
      %c0_72 = arith.constant 0 : index
      %114 = vector.load %arg9[%c0_70, %c0_71, %c0_72] : memref<4x8x8xf32, #tpu.memory_space<vmem>>, vector<1x8x8xf32>
      %115 = vector.shape_cast %114 : vector<1x8x8xf32> to vector<8x8xf32>
      %116 = vector.shape_cast %113 : vector<8x8xf32> to vector<1x8x8xf32>
      tpu.vector_store %arg9[%c0_70, %c0_71, %c0_72], %116 {strides = array<i32>} : memref<4x8x8xf32, #tpu.memory_space<vmem>>, vector<1x8x8xf32>,
      %117 = vector.extract_strided_slice %111 {offsets = [0, 0], sizes = [8, 8], strides = [1, 1]} : vector<8x32xf32> to vector<8x8xf32>
      %c0_73 = arith.constant 0 : index
      %c0_74 = arith.constant 0 : index
      %c0_75 = arith.constant 0 : index
      %118 = vector.load %arg10[%c0_73, %c0_74, %c0_75] : memref<4x8x8xf32, #tpu.memory_space<vmem>>, vector<1x8x8xf32>
      %119 = vector.shape_cast %118 : vector<1x8x8xf32> to vector<8x8xf32>
      %120 = vector.shape_cast %117 : vector<8x8xf32> to vector<1x8x8xf32>
      tpu.vector_store %arg10[%c0_73, %c0_74, %c0_75], %120 {strides = array<i32>} : memref<4x8x8xf32, #tpu.memory_space<vmem>>, vector<1x8x8xf32>,
      %121 = vector.extract_strided_slice %109 {offsets = [0, 8], sizes = [8, 8], strides = [1, 1]} : vector<8x32xf32> to vector<8x8xf32>
      %122 = tpu.transpose %121, [1, 0] : vector<8x8xf32> -> vector<8x8xf32>
      %c1_76 = arith.constant 1 : index
      %c0_77 = arith.constant 0 : index
      %c0_78 = arith.constant 0 : index
      %123 = vector.load %arg9[%c1_76, %c0_77, %c0_78] : memref<4x8x8xf32, #tpu.memory_space<vmem>>, vector<1x8x8xf32>
      %124 = vector.shape_cast %123 : vector<1x8x8xf32> to vector<8x8xf32>
      %125 = vector.shape_cast %122 : vector<8x8xf32> to vector<1x8x8xf32>
      tpu.vector_store %arg9[%c1_76, %c0_77, %c0_78], %125 {strides = array<i32>} : memref<4x8x8xf32, #tpu.memory_space<vmem>>, vector<1x8x8xf32>,
      %126 = vector.extract_strided_slice %111 {offsets = [0, 8], sizes = [8, 8], strides = [1, 1]} : vector<8x32xf32> to vector<8x8xf32>
      %c1_79 = arith.constant 1 : index
      %c0_80 = arith.constant 0 : index
      %c0_81 = arith.constant 0 : index
      %127 = vector.load %arg10[%c1_79, %c0_80, %c0_81] : memref<4x8x8xf32, #tpu.memory_space<vmem>>, vector<1x8x8xf32>
      %128 = vector.shape_cast %127 : vector<1x8x8xf32> to vector<8x8xf32>
      %129 = vector.shape_cast %126 : vector<8x8xf32> to vector<1x8x8xf32>
      tpu.vector_store %arg10[%c1_79, %c0_80, %c0_81], %129 {strides = array<i32>} : memref<4x8x8xf32, #tpu.memory_space<vmem>>, vector<1x8x8xf32>,
      %130 = vector.extract_strided_slice %109 {offsets = [0, 16], sizes = [8, 8], strides = [1, 1]} : vector<8x32xf32> to vector<8x8xf32>
      %131 = tpu.transpose %130, [1, 0] : vector<8x8xf32> -> vector<8x8xf32>
      %c2_82 = arith.constant 2 : index
      %c0_83 = arith.constant 0 : index
      %c0_84 = arith.constant 0 : index
      %132 = vector.load %arg9[%c2_82, %c0_83, %c0_84] : memref<4x8x8xf32, #tpu.memory_space<vmem>>, vector<1x8x8xf32>
      %133 = vector.shape_cast %132 : vector<1x8x8xf32> to vector<8x8xf32>
      %134 = vector.shape_cast %131 : vector<8x8xf32> to vector<1x8x8xf32>
      tpu.vector_store %arg9[%c2_82, %c0_83, %c0_84], %134 {strides = array<i32>} : memref<4x8x8xf32, #tpu.memory_space<vmem>>, vector<1x8x8xf32>,
      %135 = vector.extract_strided_slice %111 {offsets = [0, 16], sizes = [8, 8], strides = [1, 1]} : vector<8x32xf32> to vector<8x8xf32>
      %c2_85 = arith.constant 2 : index
      %c0_86 = arith.constant 0 : index
      %c0_87 = arith.constant 0 : index
      %136 = vector.load %arg10[%c2_85, %c0_86, %c0_87] : memref<4x8x8xf32, #tpu.memory_space<vmem>>, vector<1x8x8xf32>
      %137 = vector.shape_cast %136 : vector<1x8x8xf32> to vector<8x8xf32>
      %138 = vector.shape_cast %135 : vector<8x8xf32> to vector<1x8x8xf32>
      tpu.vector_store %arg10[%c2_85, %c0_86, %c0_87], %138 {strides = array<i32>} : memref<4x8x8xf32, #tpu.memory_space<vmem>>, vector<1x8x8xf32>,
      %139 = vector.extract_strided_slice %109 {offsets = [0, 24], sizes = [8, 8], strides = [1, 1]} : vector<8x32xf32> to vector<8x8xf32>
      %140 = tpu.transpose %139, [1, 0] : vector<8x8xf32> -> vector<8x8xf32>
      %c3_88 = arith.constant 3 : index
      %c0_89 = arith.constant 0 : index
      %c0_90 = arith.constant 0 : index
      %141 = vector.load %arg9[%c3_88, %c0_89, %c0_90] : memref<4x8x8xf32, #tpu.memory_space<vmem>>, vector<1x8x8xf32>
      %142 = vector.shape_cast %141 : vector<1x8x8xf32> to vector<8x8xf32>
      %143 = vector.shape_cast %140 : vector<8x8xf32> to vector<1x8x8xf32>
      tpu.vector_store %arg9[%c3_88, %c0_89, %c0_90], %143 {strides = array<i32>} : memref<4x8x8xf32, #tpu.memory_space<vmem>>, vector<1x8x8xf32>,
      %144 = vector.extract_strided_slice %111 {offsets = [0, 24], sizes = [8, 8], strides = [1, 1]} : vector<8x32xf32> to vector<8x8xf32>
      %c3_91 = arith.constant 3 : index
      %c0_92 = arith.constant 0 : index
      %c0_93 = arith.constant 0 : index
      %145 = vector.load %arg10[%c3_91, %c0_92, %c0_93] : memref<4x8x8xf32, #tpu.memory_space<vmem>>, vector<1x8x8xf32>
      %146 = vector.shape_cast %145 : vector<1x8x8xf32> to vector<8x8xf32>
      %147 = vector.shape_cast %144 : vector<8x8xf32> to vector<1x8x8xf32>
      tpu.vector_store %arg10[%c3_91, %c0_92, %c0_93], %147 {strides = array<i32>} : memref<4x8x8xf32, #tpu.memory_space<vmem>>, vector<1x8x8xf32>,
    } else {
    }
    %c16_i32 = arith.constant 16 : i32
    %3 = arith.muli %arg1, %c16_i32 : i32
    %4 = tpu.assume_multiple %3, 16 : i32
    %c0 = arith.constant 0 : index
    %5 = arith.index_cast %4 : i32 to index
    %c0_1 = arith.constant 0 : index
    %6 = vector.load %arg2[%c0, %5, %c0_1] : memref<1x16x32xf32, #tpu.memory_space<vmem>>, vector<1x16x32xf32>
    %7 = vector.shape_cast %6 : vector<1x16x32xf32> to vector<16x32xf32>
    %c0_2 = arith.constant 0 : index
    %c0_3 = arith.constant 0 : index
    %8 = vector.load %arg3[%c0_2, %c0_3] : memref<32x32xf32, #tpu.memory_space<vmem>>, vector<32x32xf32>
    %cst = arith.constant dense<0.000000e+00> : vector<16x32xf32>
    %9 = tpu.matmul %7, %8, %cst {dimension_numbers = #tpu.dot_dimension_numbers<[1], [0], [0], [1], [0, 0, 1, 1], [], []>} : vector<16x32xf32>, vector<32x32xf32>, vector<16x32xf32> -> vector<16x32xf32>
    %10 = vector.extract_strided_slice %9 {offsets = [0, 0], sizes = [16, 8], strides = [1, 1]} : vector<16x32xf32> to vector<16x8xf32>
    %c0_4 = arith.constant 0 : index
    %c0_5 = arith.constant 0 : index
    %c0_6 = arith.constant 0 : index
    %11 = vector.load %arg9[%c0_4, %c0_5, %c0_6] : memref<4x8x8xf32, #tpu.memory_space<vmem>>, vector<1x8x8xf32>
    %12 = vector.shape_cast %11 : vector<1x8x8xf32> to vector<8x8xf32>
    %cst_7 = arith.constant dense<0.000000e+00> : vector<16x8xf32>
    %13 = tpu.matmul %10, %12, %cst_7 {dimension_numbers = #tpu.dot_dimension_numbers<[1], [0], [0], [1], [0, 0, 1, 1], [], []>} : vector<16x8xf32>, vector<8x8xf32>, vector<16x8xf32> -> vector<16x8xf32>
    %cst_8 = arith.constant dense<0xFF800000> : vector<16xf32>
    %14 = vector.multi_reduction <maximumf>, %13, %cst_8 [1] : vector<16x8xf32> to vector<16xf32>
    %15 = vector.shape_cast %14 : vector<16xf32> to vector<16x1xf32>
    %16 = vector.broadcast %15 : vector<16x1xf32> to vector<16x8xf32>
    %17 = arith.subf %13, %16 : vector<16x8xf32>
    %18 = math.exp %17 : vector<16x8xf32>
    %cst_9 = arith.constant dense<0.000000e+00> : vector<16xf32>
    %19 = vector.multi_reduction <add>, %18, %cst_9 [1] : vector<16x8xf32> to vector<16xf32>
    %20 = vector.shape_cast %19 : vector<16xf32> to vector<16x1xf32>
    %21 = tpu.reciprocal %20 {approx = true} : vector<16x1xf32> -> vector<16x1xf32>
    %22 = arith.mulf %20, %21 : vector<16x1xf32>
    %cst_10 = arith.constant 2.000000e+00 : f32
    %23 = vector.broadcast %cst_10 : f32 to vector<16x1xf32>
    %24 = arith.subf %23, %22 : vector<16x1xf32>
    %25 = arith.mulf %21, %24 : vector<16x1xf32>
    %26 = vector.broadcast %25 : vector<16x1xf32> to vector<16x8xf32>
    %27 = arith.mulf %18, %26 : vector<16x8xf32>
    %c0_11 = arith.constant 0 : index
    %c0_12 = arith.constant 0 : index
    %c0_13 = arith.constant 0 : index
    %28 = vector.load %arg10[%c0_11, %c0_12, %c0_13] : memref<4x8x8xf32, #tpu.memory_space<vmem>>, vector<1x8x8xf32>
    %29 = vector.shape_cast %28 : vector<1x8x8xf32> to vector<8x8xf32>
    %cst_14 = arith.constant dense<0.000000e+00> : vector<16x8xf32>
    %30 = tpu.matmul %27, %29, %cst_14 {dimension_numbers = #tpu.dot_dimension_numbers<[1], [0], [0], [1], [0, 0, 1, 1], [], []>} : vector<16x8xf32>, vector<8x8xf32>, vector<16x8xf32> -> vector<16x8xf32>
    %c0_15 = arith.constant 0 : index
    %c0_16 = arith.constant 0 : index
    %31 = vector.load %arg11[%c0_15, %c0_16] : memref<16x32xf32, #tpu.memory_space<vmem>>, vector<16x8xf32>
    tpu.vector_store %arg11[%c0_15, %c0_16], %30 {strides = array<i32>} : memref<16x32xf32, #tpu.memory_space<vmem>>, vector<16x8xf32>,
    %32 = vector.extract_strided_slice %9 {offsets = [0, 8], sizes = [16, 8], strides = [1, 1]} : vector<16x32xf32> to vector<16x8xf32>
    %c1 = arith.constant 1 : index
    %c0_17 = arith.constant 0 : index
    %c0_18 = arith.constant 0 : index
    %33 = vector.load %arg9[%c1, %c0_17, %c0_18] : memref<4x8x8xf32, #tpu.memory_space<vmem>>, vector<1x8x8xf32>
    %34 = vector.shape_cast %33 : vector<1x8x8xf32> to vector<8x8xf32>
    %cst_19 = arith.constant dense<0.000000e+00> : vector<16x8xf32>
    %35 = tpu.matmul %32, %34, %cst_19 {dimension_numbers = #tpu.dot_dimension_numbers<[1], [0], [0], [1], [0, 0, 1, 1], [], []>} : vector<16x8xf32>, vector<8x8xf32>, vector<16x8xf32> -> vector<16x8xf32>
    %cst_20 = arith.constant dense<0xFF800000> : vector<16xf32>
    %36 = vector.multi_reduction <maximumf>, %35, %cst_20 [1] : vector<16x8xf32> to vector<16xf32>
    %37 = vector.shape_cast %36 : vector<16xf32> to vector<16x1xf32>
    %38 = vector.broadcast %37 : vector<16x1xf32> to vector<16x8xf32>
    %39 = arith.subf %35, %38 : vector<16x8xf32>
    %40 = math.exp %39 : vector<16x8xf32>
    %cst_21 = arith.constant dense<0.000000e+00> : vector<16xf32>
    %41 = vector.multi_reduction <add>, %40, %cst_21 [1] : vector<16x8xf32> to vector<16xf32>
    %42 = vector.shape_cast %41 : vector<16xf32> to vector<16x1xf32>
    %43 = tpu.reciprocal %42 {approx = true} : vector<16x1xf32> -> vector<16x1xf32>
    %44 = arith.mulf %42, %43 : vector<16x1xf32>
    %cst_22 = arith.constant 2.000000e+00 : f32
    %45 = vector.broadcast %cst_22 : f32 to vector<16x1xf32>
    %46 = arith.subf %45, %44 : vector<16x1xf32>
    %47 = arith.mulf %43, %46 : vector<16x1xf32>
    %48 = vector.broadcast %47 : vector<16x1xf32> to vector<16x8xf32>
    %49 = arith.mulf %40, %48 : vector<16x8xf32>
    %c1_23 = arith.constant 1 : index
    %c0_24 = arith.constant 0 : index
    %c0_25 = arith.constant 0 : index
    %50 = vector.load %arg10[%c1_23, %c0_24, %c0_25] : memref<4x8x8xf32, #tpu.memory_space<vmem>>, vector<1x8x8xf32>
    %51 = vector.shape_cast %50 : vector<1x8x8xf32> to vector<8x8xf32>
    %cst_26 = arith.constant dense<0.000000e+00> : vector<16x8xf32>
    %52 = tpu.matmul %49, %51, %cst_26 {dimension_numbers = #tpu.dot_dimension_numbers<[1], [0], [0], [1], [0, 0, 1, 1], [], []>} : vector<16x8xf32>, vector<8x8xf32>, vector<16x8xf32> -> vector<16x8xf32>
    %c0_27 = arith.constant 0 : index
    %c8 = arith.constant 8 : index
    %53 = vector.load %arg11[%c0_27, %c8] : memref<16x32xf32, #tpu.memory_space<vmem>>, vector<16x8xf32>
    tpu.vector_store %arg11[%c0_27, %c8], %52 {strides = array<i32>} : memref<16x32xf32, #tpu.memory_space<vmem>>, vector<16x8xf32>,
    %54 = vector.extract_strided_slice %9 {offsets = [0, 16], sizes = [16, 8], strides = [1, 1]} : vector<16x32xf32> to vector<16x8xf32>
    %c2 = arith.constant 2 : index
    %c0_28 = arith.constant 0 : index
    %c0_29 = arith.constant 0 : index
    %55 = vector.load %arg9[%c2, %c0_28, %c0_29] : memref<4x8x8xf32, #tpu.memory_space<vmem>>, vector<1x8x8xf32>
    %56 = vector.shape_cast %55 : vector<1x8x8xf32> to vector<8x8xf32>
    %cst_30 = arith.constant dense<0.000000e+00> : vector<16x8xf32>
    %57 = tpu.matmul %54, %56, %cst_30 {dimension_numbers = #tpu.dot_dimension_numbers<[1], [0], [0], [1], [0, 0, 1, 1], [], []>} : vector<16x8xf32>, vector<8x8xf32>, vector<16x8xf32> -> vector<16x8xf32>
    %cst_31 = arith.constant dense<0xFF800000> : vector<16xf32>
    %58 = vector.multi_reduction <maximumf>, %57, %cst_31 [1] : vector<16x8xf32> to vector<16xf32>
    %59 = vector.shape_cast %58 : vector<16xf32> to vector<16x1xf32>
    %60 = vector.broadcast %59 : vector<16x1xf32> to vector<16x8xf32>
    %61 = arith.subf %57, %60 : vector<16x8xf32>
    %62 = math.exp %61 : vector<16x8xf32>
    %cst_32 = arith.constant dense<0.000000e+00> : vector<16xf32>
    %63 = vector.multi_reduction <add>, %62, %cst_32 [1] : vector<16x8xf32> to vector<16xf32>
    %64 = vector.shape_cast %63 : vector<16xf32> to vector<16x1xf32>
    %65 = tpu.reciprocal %64 {approx = true} : vector<16x1xf32> -> vector<16x1xf32>
    %66 = arith.mulf %64, %65 : vector<16x1xf32>
    %cst_33 = arith.constant 2.000000e+00 : f32
    %67 = vector.broadcast %cst_33 : f32 to vector<16x1xf32>
    %68 = arith.subf %67, %66 : vector<16x1xf32>
    %69 = arith.mulf %65, %68 : vector<16x1xf32>
    %70 = vector.broadcast %69 : vector<16x1xf32> to vector<16x8xf32>
    %71 = arith.mulf %62, %70 : vector<16x8xf32>
    %c2_34 = arith.constant 2 : index
    %c0_35 = arith.constant 0 : index
    %c0_36 = arith.constant 0 : index
    %72 = vector.load %arg10[%c2_34, %c0_35, %c0_36] : memref<4x8x8xf32, #tpu.memory_space<vmem>>, vector<1x8x8xf32>
    %73 = vector.shape_cast %72 : vector<1x8x8xf32> to vector<8x8xf32>
    %cst_37 = arith.constant dense<0.000000e+00> : vector<16x8xf32>
    %74 = tpu.matmul %71, %73, %cst_37 {dimension_numbers = #tpu.dot_dimension_numbers<[1], [0], [0], [1], [0, 0, 1, 1], [], []>} : vector<16x8xf32>, vector<8x8xf32>, vector<16x8xf32> -> vector<16x8xf32>
    %c0_38 = arith.constant 0 : index
    %c16 = arith.constant 16 : index
    %75 = vector.load %arg11[%c0_38, %c16] : memref<16x32xf32, #tpu.memory_space<vmem>>, vector<16x8xf32>
    tpu.vector_store %arg11[%c0_38, %c16], %74 {strides = array<i32>} : memref<16x32xf32, #tpu.memory_space<vmem>>, vector<16x8xf32>,
    %76 = vector.extract_strided_slice %9 {offsets = [0, 24], sizes = [16, 8], strides = [1, 1]} : vector<16x32xf32> to vector<16x8xf32>
    %c3 = arith.constant 3 : index
    %c0_39 = arith.constant 0 : index
    %c0_40 = arith.constant 0 : index
    %77 = vector.load %arg9[%c3, %c0_39, %c0_40] : memref<4x8x8xf32, #tpu.memory_space<vmem>>, vector<1x8x8xf32>
    %78 = vector.shape_cast %77 : vector<1x8x8xf32> to vector<8x8xf32>
    %cst_41 = arith.constant dense<0.000000e+00> : vector<16x8xf32>
    %79 = tpu.matmul %76, %78, %cst_41 {dimension_numbers = #tpu.dot_dimension_numbers<[1], [0], [0], [1], [0, 0, 1, 1], [], []>} : vector<16x8xf32>, vector<8x8xf32>, vector<16x8xf32> -> vector<16x8xf32>
    %cst_42 = arith.constant dense<0xFF800000> : vector<16xf32>
    %80 = vector.multi_reduction <maximumf>, %79, %cst_42 [1] : vector<16x8xf32> to vector<16xf32>
    %81 = vector.shape_cast %80 : vector<16xf32> to vector<16x1xf32>
    %82 = vector.broadcast %81 : vector<16x1xf32> to vector<16x8xf32>
    %83 = arith.subf %79, %82 : vector<16x8xf32>
    %84 = math.exp %83 : vector<16x8xf32>
    %cst_43 = arith.constant dense<0.000000e+00> : vector<16xf32>
    %85 = vector.multi_reduction <add>, %84, %cst_43 [1] : vector<16x8xf32> to vector<16xf32>
    %86 = vector.shape_cast %85 : vector<16xf32> to vector<16x1xf32>
    %87 = tpu.reciprocal %86 {approx = true} : vector<16x1xf32> -> vector<16x1xf32>
    %88 = arith.mulf %86, %87 : vector<16x1xf32>
    %cst_44 = arith.constant 2.000000e+00 : f32
    %89 = vector.broadcast %cst_44 : f32 to vector<16x1xf32>
    %90 = arith.subf %89, %88 : vector<16x1xf32>
    %91 = arith.mulf %87, %90 : vector<16x1xf32>
    %92 = vector.broadcast %91 : vector<16x1xf32> to vector<16x8xf32>
    %93 = arith.mulf %84, %92 : vector<16x8xf32>
    %c3_45 = arith.constant 3 : index
    %c0_46 = arith.constant 0 : index
    %c0_47 = arith.constant 0 : index
    %94 = vector.load %arg10[%c3_45, %c0_46, %c0_47] : memref<4x8x8xf32, #tpu.memory_space<vmem>>, vector<1x8x8xf32>
    %95 = vector.shape_cast %94 : vector<1x8x8xf32> to vector<8x8xf32>
    %cst_48 = arith.constant dense<0.000000e+00> : vector<16x8xf32>
    %96 = tpu.matmul %93, %95, %cst_48 {dimension_numbers = #tpu.dot_dimension_numbers<[1], [0], [0], [1], [0, 0, 1, 1], [], []>} : vector<16x8xf32>, vector<8x8xf32>, vector<16x8xf32> -> vector<16x8xf32>
    %c0_49 = arith.constant 0 : index
    %c24 = arith.constant 24 : index
    %97 = vector.load %arg11[%c0_49, %c24] : memref<16x32xf32, #tpu.memory_space<vmem>>, vector<16x8xf32>
    tpu.vector_store %arg11[%c0_49, %c24], %96 {strides = array<i32>} : memref<16x32xf32, #tpu.memory_space<vmem>>, vector<16x8xf32>,
    %c0_50 = arith.constant 0 : index
    %c0_51 = arith.constant 0 : index
    %98 = vector.load %arg11[%c0_50, %c0_51] : memref<16x32xf32, #tpu.memory_space<vmem>>, vector<16x32xf32>
    %c0_52 = arith.constant 0 : index
    %c0_53 = arith.constant 0 : index
    %99 = vector.load %arg7[%c0_52, %c0_53] : memref<32x32xf32, #tpu.memory_space<vmem>>, vector<32x32xf32>
    %cst_54 = arith.constant dense<0.000000e+00> : vector<16x32xf32>
    %100 = tpu.matmul %98, %99, %cst_54 {dimension_numbers = #tpu.dot_dimension_numbers<[1], [0], [0], [1], [0, 0, 1, 1], [], []>} : vector<16x32xf32>, vector<32x32xf32>, vector<16x32xf32> -> vector<16x32xf32>
    %c0_55 = arith.constant 0 : index
    %c0_56 = arith.constant 0 : index
    %c0_57 = arith.constant 0 : index
    %101 = vector.load %arg8[%c0_55, %c0_56, %c0_57] : memref<1x16x32xf32, #tpu.memory_space<vmem>>, vector<1x16x32xf32>
    %102 = vector.shape_cast %101 : vector<1x16x32xf32> to vector<16x32xf32>
    %103 = vector.shape_cast %100 : vector<16x32xf32> to vector<1x16x32xf32>
    tpu.vector_store %arg8[%c0_55, %c0_56, %c0_57], %103 {strides = array<i32>} : memref<1x16x32xf32, #tpu.memory_space<vmem>>, vector<1x16x32xf32>,
    return
  }
  func.func @transform_0(%arg0: i32, %arg1: i32) -> (i32, i32, i32) {
    %c0_i32 = arith.constant 0 : i32
    %c0_i32_0 = arith.constant 0 : i32
    %c0_i32_1 = arith.constant 0 : i32
    return %arg0, %c0_i32, %c0_i32_0 : i32, i32, i32
  }
  func.func @transform_1(%arg0: i32, %arg1: i32) -> (i32, i32) {
    %c0_i32 = arith.constant 0 : i32
    %c0_i32_0 = arith.constant 0 : i32
    %c0_i32_1 = arith.constant 0 : i32
    return %c0_i32, %c0_i32_0 : i32, i32
  }
  func.func @transform_2(%arg0: i32, %arg1: i32) -> (i32, i32) {
    %c0_i32 = arith.constant 0 : i32
    %c0_i32_0 = arith.constant 0 : i32
    %c0_i32_1 = arith.constant 0 : i32
    return %c0_i32, %c0_i32_0 : i32, i32
  }
  func.func @transform_3(%arg0: i32, %arg1: i32) -> (i32, i32) {
    %c0_i32 = arith.constant 0 : i32
    %c0_i32_0 = arith.constant 0 : i32
    %c0_i32_1 = arith.constant 0 : i32
    return %c0_i32, %c0_i32_0 : i32, i32
  }
  func.func @transform_4(%arg0: i32, %arg1: i32) -> (i32, i32) {
    %c0_i32 = arith.constant 0 : i32
    %c0_i32_0 = arith.constant 0 : i32
    %c0_i32_1 = arith.constant 0 : i32
    return %c0_i32, %c0_i32_0 : i32, i32
  }
  func.func @transform_5(%arg0: i32, %arg1: i32) -> (i32, i32) {
    %c0_i32 = arith.constant 0 : i32
    %c0_i32_0 = arith.constant 0 : i32
    %c0_i32_1 = arith.constant 0 : i32
    return %c0_i32, %c0_i32_0 : i32, i32
  }
  func.func @transform_6(%arg0: i32, %arg1: i32) -> (i32, i32, i32) {
    %c0_i32 = arith.constant 0 : i32
    %c0_i32_0 = arith.constant 0 : i32
    return %arg0, %arg1, %c0_i32 : i32, i32, i32
  }
}

</mosaic_0001>

<llo_original>
// kernel: tpu_custom_call.1
$region0: #{tpu_custom_call.1}
  #allocation0 [shape = 'u32[]', space=smem, size = 0x4, offset = 0x4, fixed_abs, tag = 'smem constant byte address 0x4 - core index']
  #allocation1 [shape = 'u32[144,128]{1,0:T(1,128)}', space=vmem, size = 0x12000, scoped, tag = 'internal scratch']
  #allocation2 [shape = 'f32[4,8,8]{2,1,0:T(8,128)}', space=vmem, size = 0x4000, scoped, tag = 'scratch operand']
  #allocation3 [shape = 'f32[4,8,8]{2,1,0:T(8,128)}', space=vmem, size = 0x4000, scoped, tag = 'scratch operand']
  #allocation4 [shape = 'f32[16,32]{1,0:T(8,128)}', space=vmem, size = 0x2000, scoped, tag = 'scratch operand']
  %s0 = inlined_call_operand.hbm [shape: f32[2,16,32], index: 0, kind: input, shape index: {}]
  %s1 = inlined_call_operand.hbm [shape: f32[32,32], index: 1, kind: input, shape index: {}]
  %s2 = inlined_call_operand.hbm [shape: f32[32,32], index: 2, kind: input, shape index: {}]
  %s3 = inlined_call_operand.hbm [shape: f32[32,32], index: 3, kind: input, shape index: {}]
  %s4 = inlined_call_operand.vmem [shape: f32[8,16], index: 4, kind: input, shape index: {}]
  %s5 = inlined_call_operand.hbm [shape: f32[32,32], index: 5, kind: input, shape index: {}]
  %s6 = inlined_call_operand.hbm [shape: f32[2,16,32], index: 6, kind: output, shape index: {}]
  %s7 = sld [smem:[#allocation0]]
  $region81: #{tpu_custom_call.1} parent=0
    _
  %s9 = ssub.s32 1, %s7
  %s10 = scalar_select 0, %s9, %s7
  $region1: #{tpu_custom_call.1} parent=0
    #allocation5 [shape = 'u8[16384]{0}', space=vmem, size = 0x4000, scoped, tag = 'input window, operand 0']
    #allocation6 [shape = 's32[2]{0}', space=sflag, size = 0x8, scoped, tag = 'scoped memory for tpu_custom_call.1']
    #allocation7 [shape = 's32[2]{0}', space=sflag, size = 0x8, scoped, tag = 'scoped memory for tpu_custom_call.1']
    #allocation8 [shape = 'u8[16384]{0}', space=vmem, size = 0x4000, scoped, tag = 'input window, operand 1, single buffered']
    #allocation9 [shape = 's32[1]{0}', space=sflag, size = 0x4, scoped, tag = 'scoped memory for tpu_custom_call.1']
    #allocation10 [shape = 'u8[16384]{0}', space=vmem, size = 0x4000, scoped, tag = 'input window, operand 2, single buffered']
    #allocation11 [shape = 'u8[16384]{0}', space=vmem, size = 0x4000, scoped, tag = 'input window, operand 3, single buffered']
    #allocation12 [shape = 's32[1]{0}', space=sflag, size = 0x4, scoped, tag = 'scoped memory for tpu_custom_call.1']
    #allocation13 [shape = 'u8[16384]{0}', space=vmem, size = 0x4000, scoped, tag = 'input window, operand 5, single buffered']
    #allocation14 [shape = 'u8[16384]{0}', space=vmem, size = 0x4000, scoped, tag = 'output window, operand 0']
    %11 = vsyncpa [#allocation6], 0
    %s12 = scalar_lea.sflag [#allocation6], 1
    %13 = vsyncpa %s12, 0
    %14 = vsyncpa [#allocation9], 0
    %15 = vsyncpa [#allocation12], 0
    %16 = vsyncpa [#allocation7], 0
    %s17 = scalar_lea.sflag [#allocation7], 1
    %18 = vsyncpa %s17, 0
    loop: start=0, step=1, limit=4
    $region2: #{tpu_custom_call.1} parent=1 // loop_pre_header
      _
    $region3: #{tpu_custom_call.1} parent=1 // loop_header
      %s20 = sphi 0, %s24
      %p21 = scmp.ge.s32.totalorder %s20, 4
      %s27 = sphi 0, %s39
      %s28 = sphi 0, %s35
      %s29 = sphi 0, %s27
      %s30 = sphi 0, %s28
      %s31 = sphi 0, %s29
      %s32 = sphi 0, %s30
      %s42 = sphi 0, %s44
      %s45 = sphi 0, %s42
      %s46 = sphi 0, %s45
      %s62 = sphi 0, %s46
      %s66 = sphi 0, %s66
      %s68 = sphi 0, %s66
      %s69 = sphi 0, %s68
      %s83 = sphi 0, %s69
      %s87 = sphi 0, %s87
      %s89 = sphi 0, %s87
      %s90 = sphi 0, %s89
      %s104 = sphi 0, %s90
      %s108 = sphi 0, %s108
      %s110 = sphi 0, %s108
      %s111 = sphi 0, %s110
      %s125 = sphi 0, %s111
      %s129 = sphi 0, %s129
      %s131 = sphi 0, %s129
      %s132 = sphi 0, %s131
      %s146 = sphi 0, %s132
      %s150 = sphi 0, %s150
      %s152 = sphi 0, %s150
      %s153 = sphi 0, %s152
      %s167 = sphi 0, %s153
      %s175 = sphi 0, %s177
      %s178 = sphi 0, %s175
      %s179 = sphi 0, %s178
      %s195 = sphi 0, %s179
    $region4: #{tpu_custom_call.1} parent=1 // loop_header_branch
      %23 = sbr.rel (%p21) target = $region8
    $region5: #{tpu_custom_call.1} parent=1 // loop_body
      %s25 = ssub.s32 %s20, 1
      %s26 = ssub.s32 %s20, 2
      %s33 = sadd.s32 1, %s28
      %p34 = scmp.ge.s32.totalorder %s33, 1
      %s35 = scalar_select %p34, 0, %s33
      %s36 = sadd.s32 1, %s27
      %s37 = scalar_select %p34, %s36, %s27
      %p38 = scmp.ge.s32.totalorder %s37, 2
      %s39 = scalar_select %p38, 0, %s37
      %s40 = ssub.s32 %s27, %s39
      %p41 = scmp.eq.s32.totalorder %s40, 0
      %s43 = sadd.s32 %s42, 1
      %s44 = scalar_select %p41, %s42, %s43
      %p47 = pneg %p41
      %p48 = scmp.eq.s32.totalorder %s20, 1
      %p49 = por %p47, %p48
      %p50 = scmp.ne.s32.totalorder %s42, %s45
      %p51 = scmp.eq.s32.totalorder %s20, 0
      %p52 = por %p50, %p51
      %p53 = scmp.ne.s32.totalorder %s42, %s45
      %p54 = scmp.eq.s32.totalorder %s25, 1
      %p55 = por %p53, %p54
      %p56 = scmp.ne.s32.totalorder %s45, %s46
      %p57 = scmp.eq.s32.totalorder %s25, 0
      %p58 = por %p56, %p57
      %p59 = scmp.ne.s32.totalorder %s45, %s46
      %p60 = scmp.eq.s32.totalorder %s26, 1
      %p61 = por %p59, %p60
      %p63 = scmp.ne.s32.totalorder %s46, %s62
      %p64 = scmp.eq.s32.totalorder %s26, 0
      %p65 = por %p63, %p64
      %s67 = sadd.s32 %s66, 1
      %p70 = scmp.eq.s32.totalorder %s20, 1
      %p71 = scmp.ne.s32.totalorder %s66, %s68
      %p72 = scmp.eq.s32.totalorder %s20, 0
      %p73 = por %p71, %p72
      %p74 = scmp.ne.s32.totalorder %s66, %s68
      %p75 = scmp.eq.s32.totalorder %s25, 1
      %p76 = por %p74, %p75
      %p77 = scmp.ne.s32.totalorder %s68, %s69
      %p78 = scmp.eq.s32.totalorder %s25, 0
      %p79 = por %p77, %p78
      %p80 = scmp.ne.s32.totalorder %s68, %s69
      %p81 = scmp.eq.s32.totalorder %s26, 1
      %p82 = por %p80, %p81
      %p84 = scmp.ne.s32.totalorder %s69, %s83
      %p85 = scmp.eq.s32.totalorder %s26, 0
      %p86 = por %p84, %p85
      %s88 = sadd.s32 %s87, 1
      %p91 = scmp.eq.s32.totalorder %s20, 1
      %p92 = scmp.ne.s32.totalorder %s87, %s89
      %p93 = scmp.eq.s32.totalorder %s20, 0
      %p94 = por %p92, %p93
      %p95 = scmp.ne.s32.totalorder %s87, %s89
      %p96 = scmp.eq.s32.totalorder %s25, 1
      %p97 = por %p95, %p96
      %p98 = scmp.ne.s32.totalorder %s89, %s90
      %p99 = scmp.eq.s32.totalorder %s25, 0
      %p100 = por %p98, %p99
      %p101 = scmp.ne.s32.totalorder %s89, %s90
      %p102 = scmp.eq.s32.totalorder %s26, 1
      %p103 = por %p101, %p102
      %p105 = scmp.ne.s32.totalorder %s90, %s104
      %p106 = scmp.eq.s32.totalorder %s26, 0
      %p107 = por %p105, %p106
      %s109 = sadd.s32 %s108, 1
      %p112 = scmp.eq.s32.totalorder %s20, 1
      %p113 = scmp.ne.s32.totalorder %s108, %s110
      %p114 = scmp.eq.s32.totalorder %s20, 0
      %p115 = por %p113, %p114
      %p116 = scmp.ne.s32.totalorder %s108, %s110
      %p117 = scmp.eq.s32.totalorder %s25, 1
      %p118 = por %p116, %p117
      %p119 = scmp.ne.s32.totalorder %s110, %s111
      %p120 = scmp.eq.s32.totalorder %s25, 0
      %p121 = por %p119, %p120
      %p122 = scmp.ne.s32.totalorder %s110, %s111
      %p123 = scmp.eq.s32.totalorder %s26, 1
      %p124 = por %p122, %p123
      %p126 = scmp.ne.s32.totalorder %s111, %s125
      %p127 = scmp.eq.s32.totalorder %s26, 0
      %p128 = por %p126, %p127
      %s130 = sadd.s32 %s129, 1
      %p133 = scmp.eq.s32.totalorder %s20, 1
      %p134 = scmp.ne.s32.totalorder %s129, %s131
      %p135 = scmp.eq.s32.totalorder %s20, 0
      %p136 = por %p134, %p135
      %p137 = scmp.ne.s32.totalorder %s129, %s131
      %p138 = scmp.eq.s32.totalorder %s25, 1
      %p139 = por %p137, %p138
      %p140 = scmp.ne.s32.totalorder %s131, %s132
      %p141 = scmp.eq.s32.totalorder %s25, 0
      %p142 = por %p140, %p141
      %p143 = scmp.ne.s32.totalorder %s131, %s132
      %p144 = scmp.eq.s32.totalorder %s26, 1
      %p145 = por %p143, %p144
      %p147 = scmp.ne.s32.totalorder %s132, %s146
      %p148 = scmp.eq.s32.totalorder %s26, 0
      %p149 = por %p147, %p148
      %s151 = sadd.s32 %s150, 1
      %p154 = scmp.eq.s32.totalorder %s20, 1
      %p155 = scmp.ne.s32.totalorder %s150, %s152
      %p156 = scmp.eq.s32.totalorder %s20, 0
      %p157 = por %p155, %p156
      %p158 = scmp.ne.s32.totalorder %s150, %s152
      %p159 = scmp.eq.s32.totalorder %s25, 1
      %p160 = por %p158, %p159
      %p161 = scmp.ne.s32.totalorder %s152, %s153
      %p162 = scmp.eq.s32.totalorder %s25, 0
      %p163 = por %p161, %p162
      %p164 = scmp.ne.s32.totalorder %s152, %s153
      %p165 = scmp.eq.s32.totalorder %s26, 1
      %p166 = por %p164, %p165
      %p168 = scmp.ne.s32.totalorder %s153, %s167
      %p169 = scmp.eq.s32.totalorder %s26, 0
      %p170 = por %p168, %p169
      %s171 = ssub.s32 %s27, %s39
      %s172 = ssub.s32 %s28, %s35
      %s173 = sor.u32 %s171, %s172
      %p174 = scmp.eq.s32.totalorder %s173, 0
      %s176 = sadd.s32 %s175, 1
      %s177 = scalar_select %p174, %s175, %s176
      %p180 = pneg %p174
      %p181 = scmp.eq.s32.totalorder %s20, 1
      %p182 = por %p180, %p181
      %p183 = scmp.ne.s32.totalorder %s175, %s178
      %p184 = scmp.eq.s32.totalorder %s20, 0
      %p185 = por %p183, %p184
      %p186 = scmp.ne.s32.totalorder %s175, %s178
      %p187 = scmp.eq.s32.totalorder %s25, 1
      %p188 = por %p186, %p187
      %p189 = scmp.ne.s32.totalorder %s178, %s179
      %p190 = scmp.eq.s32.totalorder %s25, 0
      %p191 = por %p189, %p190
      %p192 = scmp.ne.s32.totalorder %s178, %s179
      %p193 = scmp.eq.s32.totalorder %s26, 1
      %p194 = por %p192, %p193
      %p196 = scmp.ne.s32.totalorder %s179, %s195
      %p197 = scmp.eq.s32.totalorder %s26, 0
      %p198 = por %p196, %p197
      %p199 = scmp.le.s32.totalorder 1, %s20
      %p200 = scmp.lt.s32.totalorder %s20, 3
      %p201 = pnand %p199, %p200
      %p202 = pneg %p201
      // Predicated region
      $region9: #{tpu_custom_call.1} parent=5 // pred_check
        _
      $region10: #{tpu_custom_call.1} parent=5 // pred_check_branch
        %204 = sbr.rel (%p201) target = $region12
      $region11: #{tpu_custom_call.1} parent=5 // pred_region
        %s205 = ssub.s32 %s20, 1
        // Predicated region
        $region13: #{tpu_custom_call.1} parent=11 // pred_check
          %p206 = pneg %p79
        $region14: #{tpu_custom_call.1} parent=11 // pred_check_branch
          %208 = sbr.rel (%p206) target = $region16
        $region15: #{tpu_custom_call.1} parent=11 // pred_region
          %s210 = ssub.s32 512, 512
          %211 = vsyncadd [#allocation9], %s210
          %s212 = sshll.u32 [#allocation8], 4
          %s213 = int_to_ptr.vmem [resolvable:$true] %s212
          %218 = dma.hbm_to_vmem [thread:$0]  %s1, 512, %s213, [#allocation9], 128, 128, 8
        $region16: #{tpu_custom_call.1} parent=11 // pred_fallthru
          _
        // Predicated region
        $region17: #{tpu_custom_call.1} parent=11 // pred_check
          %p219 = pneg %p100
        $region18: #{tpu_custom_call.1} parent=11 // pred_check_branch
          %221 = sbr.rel (%p219) target = $region20
        $region19: #{tpu_custom_call.1} parent=11 // pred_region
          %s223 = ssub.s32 512, 512
          %224 = vsyncadd [#allocation9], %s223
          %s225 = sshll.u32 [#allocation10], 4
          %s226 = int_to_ptr.vmem [resolvable:$true] %s225
          %231 = dma.hbm_to_vmem [thread:$0]  %s2, 512, %s226, [#allocation9], 128, 128, 8
        $region20: #{tpu_custom_call.1} parent=11 // pred_fallthru
          _
        // Predicated region
        $region21: #{tpu_custom_call.1} parent=11 // pred_check
          %p232 = pneg %p121
        $region22: #{tpu_custom_call.1} parent=11 // pred_check_branch
          %234 = sbr.rel (%p232) target = $region24
        $region23: #{tpu_custom_call.1} parent=11 // pred_region
          %s236 = ssub.s32 512, 512
          %237 = vsyncadd [#allocation12], %s236
          %s238 = sshll.u32 [#allocation11], 4
          %s239 = int_to_ptr.vmem [resolvable:$true] %s238
          %244 = dma.hbm_to_vmem [thread:$0]  %s3, 512, %s239, [#allocation12], 128, 128, 8
        $region24: #{tpu_custom_call.1} parent=11 // pred_fallthru
          _
        // Predicated region
        $region25: #{tpu_custom_call.1} parent=11 // pred_check
          %p245 = pneg %p142
        $region26: #{tpu_custom_call.1} parent=11 // pred_check_branch
          %247 = sbr.rel (%p245) target = $region28
        $region27: #{tpu_custom_call.1} parent=11 // pred_region
          _
        $region28: #{tpu_custom_call.1} parent=11 // pred_fallthru
          _
        // Predicated region
        $region29: #{tpu_custom_call.1} parent=11 // pred_check
          %p248 = pneg %p163
        $region30: #{tpu_custom_call.1} parent=11 // pred_check_branch
          %250 = sbr.rel (%p248) target = $region32
        $region31: #{tpu_custom_call.1} parent=11 // pred_region
          %s252 = ssub.s32 512, 512
          %253 = vsyncadd [#allocation12], %s252
          %s254 = sshll.u32 [#allocation13], 4
          %s255 = int_to_ptr.vmem [resolvable:$true] %s254
          %260 = dma.hbm_to_vmem [thread:$0]  %s5, 512, %s255, [#allocation12], 128, 128, 8
        $region32: #{tpu_custom_call.1} parent=11 // pred_fallthru
          _
      $region12: #{tpu_custom_call.1} parent=5 // pred_fallthru
        _
      %p261 = scmp.lt.s32.totalorder %s20, 2
      // Predicated region
      $region33: #{tpu_custom_call.1} parent=5 // pred_check
        %p262 = pneg %p261
      $region34: #{tpu_custom_call.1} parent=5 // pred_check_branch
        %264 = sbr.rel (%p262) target = $region36
      $region35: #{tpu_custom_call.1} parent=5 // pred_region
        // Predicated region
        $region37: #{tpu_custom_call.1} parent=35 // pred_check
          %p265 = pneg %p52
        $region38: #{tpu_custom_call.1} parent=35 // pred_check_branch
          %267 = sbr.rel (%p265) target = $region40
        $region39: #{tpu_custom_call.1} parent=35 // pred_region
          %s268 = sand.u32 %s42, 1
          %s269 = scalar_lea.sflag [#allocation6], %s268
          %s270 = sand.u32 %s42, 1
          %s271 = smul.addr %s270, 16
          %s272 = scalar_lea.vmem [#allocation5], %s271
          %s274 = ssub.s32 256, 256
          %275 = vsyncadd %s269, %s274
          %s276 = smul.addr %s27, 2
          %s277 = smul.addr %s276, 128
          %s278 = scalar_lea.hbm %s0, %s277
          %s279 = sshll.u32 %s272, 4
          %s280 = int_to_ptr.vmem [resolvable:$true] %s279
          %285 = dma.hbm_to_vmem [thread:$0]  %s278, 256, %s280, %s269, 128, 128, 8
        $region40: #{tpu_custom_call.1} parent=35 // pred_fallthru
          _
      $region36: #{tpu_custom_call.1} parent=5 // pred_fallthru
        _
      %p286 = scmp.le.s32.totalorder 1, %s20
      %p287 = scmp.lt.s32.totalorder %s20, 3
      %p288 = pnand %p286, %p287
      %p289 = pneg %p288
      // Predicated region
      $region41: #{tpu_custom_call.1} parent=5 // pred_check
        _
      $region42: #{tpu_custom_call.1} parent=5 // pred_check_branch
        %291 = sbr.rel (%p288) target = $region44
      $region43: #{tpu_custom_call.1} parent=5 // pred_region
        %s292 = ssub.s32 %s20, 1
        %s293 = sand.u32 %s45, 1
        %s294 = scalar_lea.sflag [#allocation6], %s293
        %s295 = sand.u32 %s45, 1
        %s296 = smul.addr %s295, 16
        %s297 = scalar_lea.vmem [#allocation5], %s296
        // Predicated region
        $region45: #{tpu_custom_call.1} parent=43 // pred_check
          %p298 = pneg %p58
        $region46: #{tpu_custom_call.1} parent=43 // pred_check_branch
          %300 = sbr.rel (%p298) target = $region48
        $region47: #{tpu_custom_call.1} parent=43 // pred_region
          %301 = dma.done %s294, 256
        $region48: #{tpu_custom_call.1} parent=43 // pred_fallthru
          _
        // Predicated region
        $region49: #{tpu_custom_call.1} parent=43 // pred_check
          %p302 = pneg %p79
        $region50: #{tpu_custom_call.1} parent=43 // pred_check_branch
          %304 = sbr.rel (%p302) target = $region52
        $region51: #{tpu_custom_call.1} parent=43 // pred_region
          %305 = dma.done [#allocation9], 512
        $region52: #{tpu_custom_call.1} parent=43 // pred_fallthru
          _
        // Predicated region
        $region53: #{tpu_custom_call.1} parent=43 // pred_check
          %p306 = pneg %p100
        $region54: #{tpu_custom_call.1} parent=43 // pred_check_branch
          %308 = sbr.rel (%p306) target = $region56
        $region55: #{tpu_custom_call.1} parent=43 // pred_region
          %309 = dma.done [#allocation9], 512
        $region56: #{tpu_custom_call.1} parent=43 // pred_fallthru
          _
        // Predicated region
        $region57: #{tpu_custom_call.1} parent=43 // pred_check
          %p310 = pneg %p121
        $region58: #{tpu_custom_call.1} parent=43 // pred_check_branch
          %312 = sbr.rel (%p310) target = $region60
        $region59: #{tpu_custom_call.1} parent=43 // pred_region
          %313 = dma.done [#allocation12], 512
        $region60: #{tpu_custom_call.1} parent=43 // pred_fallthru
          _
        // Predicated region
        $region61: #{tpu_custom_call.1} parent=43 // pred_check
          %p314 = pneg %p163
        $region62: #{tpu_custom_call.1} parent=43 // pred_check_branch
          %316 = sbr.rel (%p314) target = $region64
        $region63: #{tpu_custom_call.1} parent=43 // pred_region
          %317 = dma.done [#allocation12], 512
        $region64: #{tpu_custom_call.1} parent=43 // pred_fallthru
          _
        %s318 = sand.u32 %s45, 1
        %s319 = scalar_lea.sflag [#allocation6], %s318
        %s320 = sand.u32 %s45, 1
        %s321 = smul.addr %s320, 16
        %s322 = scalar_lea.vmem [#allocation5], %s321
        %p323 = pneg %p58
        %p324 = pneg %p55
        %p325 = pneg %p79
        %p326 = pneg %p76
        %p327 = pneg %p100
        %p328 = pneg %p97
        %p329 = pneg %p121
        %p330 = pneg %p118
        %p331 = pneg %p142
        %p332 = pneg %p139
        %p333 = pneg %p163
        %p334 = pneg %p160
        %p335 = pneg %p191
        %p336 = pneg %p188
        %s337 = sand.u32 %s178, 1
        %s338 = scalar_lea.sflag [#allocation7], %s337
        %s339 = sand.u32 %s178, 1
        %s340 = smul.addr %s339, 16
        %s341 = scalar_lea.vmem [#allocation14], %s340
        %s342 = smul.u32 2, %s30
        %p343 = scmp.eq.s32.totalorder %s30, 0
        // Predicated region
        $region65: #{tpu_custom_call.1} parent=43 // pred_check
          %p344 = pneg %p343
        $region66: #{tpu_custom_call.1} parent=43 // pred_check_branch
          %346 = sbr.rel (%p344) target = $region68
        $region67: #{tpu_custom_call.1} parent=43 // pred_region
          %v347 = vld [vmem:[%s297] sm:$0xff]
          %v348 = vld [vmem:[%s297 + $0x8] sm:$0xff]
          %v349 = vld [vmem:[%s4] sm:$0xff]
          %vm350 = vcmask 130048
          %v352 = vsel %vm350, %v349, 0
          %354 = vmatprep.subr.mxu0 0.0
          %355 = vmatpush1.msra.mxu0 %v347
          %356 = vmatprep.subr.mxu0 0.0
          %357 = vmatpush1.msra.mxu0 %v348
          %358 = vmatprep.subr.mxu0 0.0
          %359 = vmatpush1.msra.mxu0 0.0
          %360 = vmatprep.subr.mxu0 0.0
          %361 = vmatpush1.msra.mxu0 0.0
          %362 = vmatprep.subr.mxu0 0.0
          %363 = vmatpush1.msra.mxu0 0.0
          %364 = vmatprep.subr.mxu0 0.0
          %365 = vmatpush1.msra.mxu0 0.0
          %366 = vmatprep.subr.mxu0 0.0
          %367 = vmatpush1.msra.mxu0 0.0
          %368 = vmatprep.subr.mxu0 0.0
          %369 = vmatpush1.msra.mxu0 0.0
          %370 = vmatprep.subr.mxu0 0.0
          %371 = vmatpush1.msra.mxu0 0.0
          %372 = vmatprep.subr.mxu0 0.0
          %373 = vmatpush1.msra.mxu0 0.0
          %374 = vmatprep.subr.mxu0 0.0
          %375 = vmatpush1.msra.mxu0 0.0
          %376 = vmatprep.subr.mxu0 0.0
          %377 = vmatpush1.msra.mxu0 0.0
          %378 = vmatprep.subr.mxu0 0.0
          %379 = vmatpush1.msra.mxu0 0.0
          %380 = vmatprep.subr.mxu0 0.0
          %381 = vmatpush1.msra.mxu0 0.0
          %382 = vmatprep.subr.mxu0 0.0
          %383 = vmatpush1.msra.mxu0 0.0
          %384 = vmatprep.subr.mxu0 0.0
          %385 = vmatpush1.msra.mxu0 0.0
          %386 = vmatprep.subr.mxu0 0.0
          %387 = vmatpush1.msra.mxu0 0.0
          %388 = vmatprep.subr.mxu0 0.0
          %389 = vmatpush1.msra.mxu0 0.0
          %390 = vmatprep.subr.mxu0 0.0
          %391 = vmatpush1.msra.mxu0 0.0
          %392 = vmatprep.subr.mxu0 0.0
          %393 = vmatpush1.msra.mxu0 0.0
          %394 = vmatprep.subr.mxu0 0.0
          %395 = vmatpush1.msra.mxu0 0.0
          %396 = vmatprep.subr.mxu0 0.0
          %397 = vmatpush1.msra.mxu0 0.0
          %398 = vmatprep.subr.mxu0 0.0
          %399 = vmatpush1.msra.mxu0 0.0
          %400 = vmatprep.subr.mxu0 0.0
          %401 = vmatpush1.msra.mxu0 0.0
          %402 = vmatprep.subr.mxu0 0.0
          %403 = vmatpush1.msra.mxu0 0.0
          %404 = vmatprep.subr.mxu0 0.0
          %405 = vmatpush1.msra.mxu0 0.0
          %406 = vmatprep.subr.mxu0 0.0
          %407 = vmatpush1.msra.mxu0 0.0
          %408 = vmatprep.subr.mxu0 0.0
          %409 = vmatpush1.msra.mxu0 0.0
          %410 = vmatprep.subr.mxu0 0.0
          %411 = vmatpush1.msra.mxu0 0.0
          %412 = vmatprep.subr.mxu0 0.0
          %413 = vmatpush1.msra.mxu0 0.0
          %414 = vmatprep.subr.mxu0 0.0
          %415 = vmatpush1.msra.mxu0 0.0
          %416 = vmatprep.subr.mxu0 0.0
          %417 = vmatpush1.msra.mxu0 0.0
          %418 = vmatprep.mubr.f32.mxu0 0.0
          %419 = vmatmul.mubr.f32.gmra.mrb[0].mxu0 %v352
          %v420 = vpop.f32.mrb[0].mxu0
          %v421 = vadd.f32 0.0, %v420
          %v422 = vpop.f32.mrb[0].mxu0
          %423 = vdwg.mxu0
          %v424 = vld [vmem:[#allocation10] sm:$0xff]
          %v425 = vld [vmem:[#allocation10 + $0x8] sm:$0xff]
          %v426 = vld [vmem:[#allocation10 + $0x10] sm:$0xff]
          %v427 = vld [vmem:[#allocation10 + $0x18] sm:$0xff]
          %vm428 = vcmask 261120
          %v430 = vsel %vm428, %v421, 0
          %432 = vmatprep.subr.mxu0 0.0
          %433 = vmatpush1.msra.mxu0 %v424
          %434 = vmatprep.subr.mxu0 0.0
          %435 = vmatpush1.msra.mxu0 %v425
          %436 = vmatprep.subr.mxu0 0.0
          %437 = vmatpush1.msra.mxu0 %v426
          %438 = vmatprep.subr.mxu0 0.0
          %439 = vmatpush1.msra.mxu0 %v427
          %440 = vmatprep.subr.mxu0 0.0
          %441 = vmatpush1.msra.mxu0 0.0
          %442 = vmatprep.subr.mxu0 0.0
          %443 = vmatpush1.msra.mxu0 0.0
          %444 = vmatprep.subr.mxu0 0.0
          %445 = vmatpush1.msra.mxu0 0.0
          %446 = vmatprep.subr.mxu0 0.0
          %447 = vmatpush1.msra.mxu0 0.0
          %448 = vmatprep.subr.mxu0 0.0
          %449 = vmatpush1.msra.mxu0 0.0
          %450 = vmatprep.subr.mxu0 0.0
          %451 = vmatpush1.msra.mxu0 0.0
          %452 = vmatprep.subr.mxu0 0.0
          %453 = vmatpush1.msra.mxu0 0.0
          %454 = vmatprep.subr.mxu0 0.0
          %455 = vmatpush1.msra.mxu0 0.0
          %456 = vmatprep.subr.mxu0 0.0
          %457 = vmatpush1.msra.mxu0 0.0
          %458 = vmatprep.subr.mxu0 0.0
          %459 = vmatpush1.msra.mxu0 0.0
          %460 = vmatprep.subr.mxu0 0.0
          %461 = vmatpush1.msra.mxu0 0.0
          %462 = vmatprep.subr.mxu0 0.0
          %463 = vmatpush1.msra.mxu0 0.0
          %464 = vmatprep.subr.mxu0 0.0
          %465 = vmatpush1.msra.mxu0 0.0
          %466 = vmatprep.subr.mxu0 0.0
          %467 = vmatpush1.msra.mxu0 0.0
          %468 = vmatprep.subr.mxu0 0.0
          %469 = vmatpush1.msra.mxu0 0.0
          %470 = vmatprep.subr.mxu0 0.0
          %471 = vmatpush1.msra.mxu0 0.0
          %472 = vmatprep.subr.mxu0 0.0
          %473 = vmatpush1.msra.mxu0 0.0
          %474 = vmatprep.subr.mxu0 0.0
          %475 = vmatpush1.msra.mxu0 0.0
          %476 = vmatprep.subr.mxu0 0.0
          %477 = vmatpush1.msra.mxu0 0.0
          %478 = vmatprep.subr.mxu0 0.0
          %479 = vmatpush1.msra.mxu0 0.0
          %480 = vmatprep.subr.mxu0 0.0
          %481 = vmatpush1.msra.mxu0 0.0
          %482 = vmatprep.subr.mxu0 0.0
          %483 = vmatpush1.msra.mxu0 0.0
          %484 = vmatprep.subr.mxu0 0.0
          %485 = vmatpush1.msra.mxu0 0.0
          %486 = vmatprep.subr.mxu0 0.0
          %487 = vmatpush1.msra.mxu0 0.0
          %488 = vmatprep.subr.mxu0 0.0
          %489 = vmatpush1.msra.mxu0 0.0
          %490 = vmatprep.subr.mxu0 0.0
          %491 = vmatpush1.msra.mxu0 0.0
          %492 = vmatprep.subr.mxu0 0.0
          %493 = vmatpush1.msra.mxu0 0.0
          %494 = vmatprep.subr.mxu0 0.0
          %495 = vmatpush1.msra.mxu0 0.0
          %496 = vmatprep.mubr.f32.mxu0 0.0
          %497 = vmatmul.mubr.f32.gmra.mrb[0].mxu0 %v430
          %v498 = vpop.f32.mrb[0].mxu0
          %v499 = vadd.f32 0.0, %v498
          %v500 = vpop.f32.mrb[0].mxu0
          %501 = vdwg.mxu0
          %v502 = vld [vmem:[#allocation11] sm:$0xff]
          %v503 = vld [vmem:[#allocation11 + $0x8] sm:$0xff]
          %v504 = vld [vmem:[#allocation11 + $0x10] sm:$0xff]
          %v505 = vld [vmem:[#allocation11 + $0x18] sm:$0xff]
          %506 = vmatprep.subr.mxu0 0.0
          %507 = vmatpush1.msra.mxu0 %v502
          %508 = vmatprep.subr.mxu0 0.0
          %509 = vmatpush1.msra.mxu0 %v503
          %510 = vmatprep.subr.mxu0 0.0
          %511 = vmatpush1.msra.mxu0 %v504
          %512 = vmatprep.subr.mxu0 0.0
          %513 = vmatpush1.msra.mxu0 %v505
          %514 = vmatprep.subr.mxu0 0.0
          %515 = vmatpush1.msra.mxu0 0.0
          %516 = vmatprep.subr.mxu0 0.0
          %517 = vmatpush1.msra.mxu0 0.0
          %518 = vmatprep.subr.mxu0 0.0
          %519 = vmatpush1.msra.mxu0 0.0
          %520 = vmatprep.subr.mxu0 0.0
          %521 = vmatpush1.msra.mxu0 0.0
          %522 = vmatprep.subr.mxu0 0.0
          %523 = vmatpush1.msra.mxu0 0.0
          %524 = vmatprep.subr.mxu0 0.0
          %525 = vmatpush1.msra.mxu0 0.0
          %526 = vmatprep.subr.mxu0 0.0
          %527 = vmatpush1.msra.mxu0 0.0
          %528 = vmatprep.subr.mxu0 0.0
          %529 = vmatpush1.msra.mxu0 0.0
          %530 = vmatprep.subr.mxu0 0.0
          %531 = vmatpush1.msra.mxu0 0.0
          %532 = vmatprep.subr.mxu0 0.0
          %533 = vmatpush1.msra.mxu0 0.0
          %534 = vmatprep.subr.mxu0 0.0
          %535 = vmatpush1.msra.mxu0 0.0
          %536 = vmatprep.subr.mxu0 0.0
          %537 = vmatpush1.msra.mxu0 0.0
          %538 = vmatprep.subr.mxu0 0.0
          %539 = vmatpush1.msra.mxu0 0.0
          %540 = vmatprep.subr.mxu0 0.0
          %541 = vmatpush1.msra.mxu0 0.0
          %542 = vmatprep.subr.mxu0 0.0
          %543 = vmatpush1.msra.mxu0 0.0
          %544 = vmatprep.subr.mxu0 0.0
          %545 = vmatpush1.msra.mxu0 0.0
          %546 = vmatprep.subr.mxu0 0.0
          %547 = vmatpush1.msra.mxu0 0.0
          %548 = vmatprep.subr.mxu0 0.0
          %549 = vmatpush1.msra.mxu0 0.0
          %550 = vmatprep.subr.mxu0 0.0
          %551 = vmatpush1.msra.mxu0 0.0
          %552 = vmatprep.subr.mxu0 0.0
          %553 = vmatpush1.msra.mxu0 0.0
          %554 = vmatprep.subr.mxu0 0.0
          %555 = vmatpush1.msra.mxu0 0.0
          %556 = vmatprep.subr.mxu0 0.0
          %557 = vmatpush1.msra.mxu0 0.0
          %558 = vmatprep.subr.mxu0 0.0
          %559 = vmatpush1.msra.mxu0 0.0
          %560 = vmatprep.subr.mxu0 0.0
          %561 = vmatpush1.msra.mxu0 0.0
          %562 = vmatprep.subr.mxu0 0.0
          %563 = vmatpush1.msra.mxu0 0.0
          %564 = vmatprep.subr.mxu0 0.0
          %565 = vmatpush1.msra.mxu0 0.0
          %566 = vmatprep.subr.mxu0 0.0
          %567 = vmatpush1.msra.mxu0 0.0
          %568 = vmatprep.subr.mxu0 0.0
          %569 = vmatpush1.msra.mxu0 0.0
          %570 = vmatprep.mubr.f32.mxu0 0.0
          %571 = vmatmul.mubr.f32.gmra.mrb[0].mxu0 %v430
          %v572 = vpop.f32.mrb[0].mxu0
          %v573 = vadd.f32 0.0, %v572
          %v574 = vpop.f32.mrb[0].mxu0
          %575 = vdwg.mxu0
          %576 = vxpose.xlu0.b32.start [1/16] %v499, 128
          %577 = vxpose.xlu0.b32.cont [2/16] 0.0, 128
          %578 = vxpose.xlu0.b32.cont [3/16] 0.0, 128
          %579 = vxpose.xlu0.b32.cont [4/16] 0.0, 128
          %580 = vxpose.xlu0.b32.cont [5/16] 0.0, 128
          %581 = vxpose.xlu0.b32.cont [6/16] 0.0, 128
          %582 = vxpose.xlu0.b32.cont [7/16] 0.0, 128
          %583 = vxpose.xlu0.b32.cont [8/16] 0.0, 128
          %584 = vxpose.xlu0.b32.cont [9/16] 0.0, 128
          %585 = vxpose.xlu0.b32.cont [10/16] 0.0, 128
          %586 = vxpose.xlu0.b32.cont [11/16] 0.0, 128
          %587 = vxpose.xlu0.b32.cont [12/16] 0.0, 128
          %588 = vxpose.xlu0.b32.cont [13/16] 0.0, 128
          %589 = vxpose.xlu0.b32.cont [14/16] 0.0, 128
          %590 = vxpose.xlu0.b32.cont [15/16] 0.0, 128
          %591 = vxpose.xlu0.b32.end [16/16] 0.0, 128
          %v592 = vpop.trf.xlu0
          %v593 = vpop.trf.xlu0
          %v594 = vpop.trf.xlu0
          %v595 = vpop.trf.xlu0
          %v596 = vpop.trf.xlu0
          %v597 = vpop.trf.xlu0
          %v598 = vpop.trf.xlu0
          %v599 = vpop.trf.xlu0
          %v600 = vpop.trf.xlu0
          %v601 = vpop.trf.xlu0
          %v602 = vpop.trf.xlu0
          %v603 = vpop.trf.xlu0
          %v604 = vpop.trf.xlu0
          %v605 = vpop.trf.xlu0
          %v606 = vpop.trf.xlu0
          %v607 = vpop.trf.xlu0
          %vm608 = vcmask 64512
          %609 = vst.msk [vmem:[#allocation2] sm:$0xff] %vm608, %v592
          %610 = vst.msk [vmem:[#allocation3] sm:$0xff] %vm608, %v573
          %612 = vrot.lane.b32.xlu0 %v499, 120
          %v613 = vpop.permute.xlu0 %612
          %615 = vxpose.xlu0.b32.start [1/16] %v613, 128
          %616 = vxpose.xlu0.b32.cont [2/16] 0.0, 128
          %617 = vxpose.xlu0.b32.cont [3/16] 0.0, 128
          %618 = vxpose.xlu0.b32.cont [4/16] 0.0, 128
          %619 = vxpose.xlu0.b32.cont [5/16] 0.0, 128
          %620 = vxpose.xlu0.b32.cont [6/16] 0.0, 128
          %621 = vxpose.xlu0.b32.cont [7/16] 0.0, 128
          %622 = vxpose.xlu0.b32.cont [8/16] 0.0, 128
          %623 = vxpose.xlu0.b32.cont [9/16] 0.0, 128
          %624 = vxpose.xlu0.b32.cont [10/16] 0.0, 128
          %625 = vxpose.xlu0.b32.cont [11/16] 0.0, 128
          %626 = vxpose.xlu0.b32.cont [12/16] 0.0, 128
          %627 = vxpose.xlu0.b32.cont [13/16] 0.0, 128
          %628 = vxpose.xlu0.b32.cont [14/16] 0.0, 128
          %629 = vxpose.xlu0.b32.cont [15/16] 0.0, 128
          %630 = vxpose.xlu0.b32.end [16/16] 0.0, 128
          %v631 = vpop.trf.xlu0
          %v632 = vpop.trf.xlu0
          %v633 = vpop.trf.xlu0
          %v634 = vpop.trf.xlu0
          %v635 = vpop.trf.xlu0
          %v636 = vpop.trf.xlu0
          %v637 = vpop.trf.xlu0
          %v638 = vpop.trf.xlu0
          %v639 = vpop.trf.xlu0
          %v640 = vpop.trf.xlu0
          %v641 = vpop.trf.xlu0
          %v642 = vpop.trf.xlu0
          %v643 = vpop.trf.xlu0
          %v644 = vpop.trf.xlu0
          %v645 = vpop.trf.xlu0
          %v646 = vpop.trf.xlu0
          %s647 = scalar_lea.vmem [#allocation2], 8
          %648 = vst.msk [vmem:[%s647] sm:$0xff] %vm608, %v631
          %650 = vrot.lane.b32.xlu0 %v573, 120
          %v651 = vpop.permute.xlu0 %650
          %s653 = scalar_lea.vmem [#allocation3], 8
          %654 = vst.msk [vmem:[%s653] sm:$0xff] %vm608, %v651
          %655 = vrot.lane.b32.xlu0 %v499, 112
          %v656 = vpop.permute.xlu0 %655
          %658 = vxpose.xlu0.b32.start [1/16] %v656, 128
          %659 = vxpose.xlu0.b32.cont [2/16] 0.0, 128
          %660 = vxpose.xlu0.b32.cont [3/16] 0.0, 128
          %661 = vxpose.xlu0.b32.cont [4/16] 0.0, 128
          %662 = vxpose.xlu0.b32.cont [5/16] 0.0, 128
          %663 = vxpose.xlu0.b32.cont [6/16] 0.0, 128
          %664 = vxpose.xlu0.b32.cont [7/16] 0.0, 128
          %665 = vxpose.xlu0.b32.cont [8/16] 0.0, 128
          %666 = vxpose.xlu0.b32.cont [9/16] 0.0, 128
          %667 = vxpose.xlu0.b32.cont [10/16] 0.0, 128
          %668 = vxpose.xlu0.b32.cont [11/16] 0.0, 128
          %669 = vxpose.xlu0.b32.cont [12/16] 0.0, 128
          %670 = vxpose.xlu0.b32.cont [13/16] 0.0, 128
          %671 = vxpose.xlu0.b32.cont [14/16] 0.0, 128
          %672 = vxpose.xlu0.b32.cont [15/16] 0.0, 128
          %673 = vxpose.xlu0.b32.end [16/16] 0.0, 128
          %v674 = vpop.trf.xlu0
          %v675 = vpop.trf.xlu0
          %v676 = vpop.trf.xlu0
          %v677 = vpop.trf.xlu0
          %v678 = vpop.trf.xlu0
          %v679 = vpop.trf.xlu0
          %v680 = vpop.trf.xlu0
          %v681 = vpop.trf.xlu0
          %v682 = vpop.trf.xlu0
          %v683 = vpop.trf.xlu0
          %v684 = vpop.trf.xlu0
          %v685 = vpop.trf.xlu0
          %v686 = vpop.trf.xlu0
          %v687 = vpop.trf.xlu0
          %v688 = vpop.trf.xlu0
          %v689 = vpop.trf.xlu0
          %s690 = scalar_lea.vmem [#allocation2], 16
          %691 = vst.msk [vmem:[%s690] sm:$0xff] %vm608, %v674
          %692 = vrot.lane.b32.xlu0 %v573, 112
          %v693 = vpop.permute.xlu0 %692
          %s695 = scalar_lea.vmem [#allocation3], 16
          %696 = vst.msk [vmem:[%s695] sm:$0xff] %vm608, %v693
          %697 = vrot.lane.b32.xlu0 %v499, 104
          %v698 = vpop.permute.xlu0 %697
          %700 = vxpose.xlu0.b32.start [1/16] %v698, 128
          %701 = vxpose.xlu0.b32.cont [2/16] 0.0, 128
          %702 = vxpose.xlu0.b32.cont [3/16] 0.0, 128
          %703 = vxpose.xlu0.b32.cont [4/16] 0.0, 128
          %704 = vxpose.xlu0.b32.cont [5/16] 0.0, 128
          %705 = vxpose.xlu0.b32.cont [6/16] 0.0, 128
          %706 = vxpose.xlu0.b32.cont [7/16] 0.0, 128
          %707 = vxpose.xlu0.b32.cont [8/16] 0.0, 128
          %708 = vxpose.xlu0.b32.cont [9/16] 0.0, 128
          %709 = vxpose.xlu0.b32.cont [10/16] 0.0, 128
          %710 = vxpose.xlu0.b32.cont [11/16] 0.0, 128
          %711 = vxpose.xlu0.b32.cont [12/16] 0.0, 128
          %712 = vxpose.xlu0.b32.cont [13/16] 0.0, 128
          %713 = vxpose.xlu0.b32.cont [14/16] 0.0, 128
          %714 = vxpose.xlu0.b32.cont [15/16] 0.0, 128
          %715 = vxpose.xlu0.b32.end [16/16] 0.0, 128
          %v716 = vpop.trf.xlu0
          %v717 = vpop.trf.xlu0
          %v718 = vpop.trf.xlu0
          %v719 = vpop.trf.xlu0
          %v720 = vpop.trf.xlu0
          %v721 = vpop.trf.xlu0
          %v722 = vpop.trf.xlu0
          %v723 = vpop.trf.xlu0
          %v724 = vpop.trf.xlu0
          %v725 = vpop.trf.xlu0
          %v726 = vpop.trf.xlu0
          %v727 = vpop.trf.xlu0
          %v728 = vpop.trf.xlu0
          %v729 = vpop.trf.xlu0
          %v730 = vpop.trf.xlu0
          %v731 = vpop.trf.xlu0
          %s732 = scalar_lea.vmem [#allocation2], 24
          %733 = vst.msk [vmem:[%s732] sm:$0xff] %vm608, %v716
          %734 = vrot.lane.b32.xlu0 %v573, 104
          %v735 = vpop.permute.xlu0 %734
          %s737 = scalar_lea.vmem [#allocation3], 24
          %738 = vst.msk [vmem:[%s737] sm:$0xff] %vm608, %v735
        $region68: #{tpu_custom_call.1} parent=43 // pred_fallthru
          _
        %s739 = smul.u32 %s30, 16
        %s740 = scalar_lea.vmem %s297, %s739 [#allocation5]
        %v741 = vld [vmem:[%s740] sm:$0xff]
        %v742 = vld [vmem:[%s740 + $0x8] sm:$0xff]
        %v743 = vld [vmem:[#allocation8] sm:$0xff]
        %v744 = vld [vmem:[#allocation8 + $0x8] sm:$0xff]
        %v745 = vld [vmem:[#allocation8 + $0x10] sm:$0xff]
        %v746 = vld [vmem:[#allocation8 + $0x18] sm:$0xff]
        %vm747 = vcmask 261120
        %v749 = vsel %vm747, %v741, 0
        %v752 = vsel %vm747, %v742, 0
        %754 = vmatprep.subr.mxu0 0.0
        %755 = vmatpush1.msra.mxu0 %v743
        %756 = vmatprep.subr.mxu0 0.0
        %757 = vmatpush1.msra.mxu0 %v744
        %758 = vmatprep.subr.mxu0 0.0
        %759 = vmatpush1.msra.mxu0 %v745
        %760 = vmatprep.subr.mxu0 0.0
        %761 = vmatpush1.msra.mxu0 %v746
        %762 = vmatprep.subr.mxu0 0.0
        %763 = vmatpush1.msra.mxu0 0.0
        %764 = vmatprep.subr.mxu0 0.0
        %765 = vmatpush1.msra.mxu0 0.0
        %766 = vmatprep.subr.mxu0 0.0
        %767 = vmatpush1.msra.mxu0 0.0
        %768 = vmatprep.subr.mxu0 0.0
        %769 = vmatpush1.msra.mxu0 0.0
        %770 = vmatprep.subr.mxu0 0.0
        %771 = vmatpush1.msra.mxu0 0.0
        %772 = vmatprep.subr.mxu0 0.0
        %773 = vmatpush1.msra.mxu0 0.0
        %774 = vmatprep.subr.mxu0 0.0
        %775 = vmatpush1.msra.mxu0 0.0
        %776 = vmatprep.subr.mxu0 0.0
        %777 = vmatpush1.msra.mxu0 0.0
        %778 = vmatprep.subr.mxu0 0.0
        %779 = vmatpush1.msra.mxu0 0.0
        %780 = vmatprep.subr.mxu0 0.0
        %781 = vmatpush1.msra.mxu0 0.0
        %782 = vmatprep.subr.mxu0 0.0
        %783 = vmatpush1.msra.mxu0 0.0
        %784 = vmatprep.subr.mxu0 0.0
        %785 = vmatpush1.msra.mxu0 0.0
        %786 = vmatprep.subr.mxu0 0.0
        %787 = vmatpush1.msra.mxu0 0.0
        %788 = vmatprep.subr.mxu0 0.0
        %789 = vmatpush1.msra.mxu0 0.0
        %790 = vmatprep.subr.mxu0 0.0
        %791 = vmatpush1.msra.mxu0 0.0
        %792 = vmatprep.subr.mxu0 0.0
        %793 = vmatpush1.msra.mxu0 0.0
        %794 = vmatprep.subr.mxu0 0.0
        %795 = vmatpush1.msra.mxu0 0.0
        %796 = vmatprep.subr.mxu0 0.0
        %797 = vmatpush1.msra.mxu0 0.0
        %798 = vmatprep.subr.mxu0 0.0
        %799 = vmatpush1.msra.mxu0 0.0
        %800 = vmatprep.subr.mxu0 0.0
        %801 = vmatpush1.msra.mxu0 0.0
        %802 = vmatprep.subr.mxu0 0.0
        %803 = vmatpush1.msra.mxu0 0.0
        %804 = vmatprep.subr.mxu0 0.0
        %805 = vmatpush1.msra.mxu0 0.0
        %806 = vmatprep.subr.mxu0 0.0
        %807 = vmatpush1.msra.mxu0 0.0
        %808 = vmatprep.subr.mxu0 0.0
        %809 = vmatpush1.msra.mxu0 0.0
        %810 = vmatprep.subr.mxu0 0.0
        %811 = vmatpush1.msra.mxu0 0.0
        %812 = vmatprep.subr.mxu0 0.0
        %813 = vmatpush1.msra.mxu0 0.0
        %814 = vmatprep.subr.mxu0 0.0
        %815 = vmatpush1.msra.mxu0 0.0
        %816 = vmatprep.subr.mxu0 0.0
        %817 = vmatpush1.msra.mxu0 0.0
        %818 = vmatprep.mubr.f32.mxu0 0.0
        %819 = vmatmul.mubr.f32.gmra.mrb[0].mxu0 %v749
        %v820 = vpop.f32.mrb[0].mxu0
        %v821 = vadd.f32 0.0, %v820
        %v822 = vpop.f32.mrb[0].mxu0
        %823 = vmatprep.mubr.f32.mxu0 0.0
        %824 = vmatmul.mubr.f32.gmra.mrb[0].mxu0 %v752
        %v825 = vpop.f32.mrb[0].mxu0
        %v826 = vadd.f32 0.0, %v825
        %v827 = vpop.f32.mrb[0].mxu0
        %828 = vdwg.mxu0
        %v829 = vld [vmem:[#allocation2] sm:$0xff]
        %vm830 = vcmask 64512
        %v832 = vsel %vm830, %v821, 0
        %v835 = vsel %vm830, %v826, 0
        %837 = vmatprep.subr.mxu0 0.0
        %838 = vmatpush1.msra.mxu0 %v829
        %839 = vmatprep.subr.mxu0 0.0
        %840 = vmatpush1.msra.mxu0 0.0
        %841 = vmatprep.subr.mxu0 0.0
        %842 = vmatpush1.msra.mxu0 0.0
        %843 = vmatprep.subr.mxu0 0.0
        %844 = vmatpush1.msra.mxu0 0.0
        %845 = vmatprep.subr.mxu0 0.0
        %846 = vmatpush1.msra.mxu0 0.0
        %847 = vmatprep.subr.mxu0 0.0
        %848 = vmatpush1.msra.mxu0 0.0
        %849 = vmatprep.subr.mxu0 0.0
        %850 = vmatpush1.msra.mxu0 0.0
        %851 = vmatprep.subr.mxu0 0.0
        %852 = vmatpush1.msra.mxu0 0.0
        %853 = vmatprep.subr.mxu0 0.0
        %854 = vmatpush1.msra.mxu0 0.0
        %855 = vmatprep.subr.mxu0 0.0
        %856 = vmatpush1.msra.mxu0 0.0
        %857 = vmatprep.subr.mxu0 0.0
        %858 = vmatpush1.msra.mxu0 0.0
        %859 = vmatprep.subr.mxu0 0.0
        %860 = vmatpush1.msra.mxu0 0.0
        %861 = vmatprep.subr.mxu0 0.0
        %862 = vmatpush1.msra.mxu0 0.0
        %863 = vmatprep.subr.mxu0 0.0
        %864 = vmatpush1.msra.mxu0 0.0
        %865 = vmatprep.subr.mxu0 0.0
        %866 = vmatpush1.msra.mxu0 0.0
        %867 = vmatprep.subr.mxu0 0.0
        %868 = vmatpush1.msra.mxu0 0.0
        %869 = vmatprep.subr.mxu0 0.0
        %870 = vmatpush1.msra.mxu0 0.0
        %871 = vmatprep.subr.mxu0 0.0
        %872 = vmatpush1.msra.mxu0 0.0
        %873 = vmatprep.subr.mxu0 0.0
        %874 = vmatpush1.msra.mxu0 0.0
        %875 = vmatprep.subr.mxu0 0.0
        %876 = vmatpush1.msra.mxu0 0.0
        %877 = vmatprep.subr.mxu0 0.0
        %878 = vmatpush1.msra.mxu0 0.0
        %879 = vmatprep.subr.mxu0 0.0
        %880 = vmatpush1.msra.mxu0 0.0
        %881 = vmatprep.subr.mxu0 0.0
        %882 = vmatpush1.msra.mxu0 0.0
        %883 = vmatprep.subr.mxu0 0.0
        %884 = vmatpush1.msra.mxu0 0.0
        %885 = vmatprep.subr.mxu0 0.0
        %886 = vmatpush1.msra.mxu0 0.0
        %887 = vmatprep.subr.mxu0 0.0
        %888 = vmatpush1.msra.mxu0 0.0
        %889 = vmatprep.subr.mxu0 0.0
        %890 = vmatpush1.msra.mxu0 0.0
        %891 = vmatprep.subr.mxu0 0.0
        %892 = vmatpush1.msra.mxu0 0.0
        %893 = vmatprep.subr.mxu0 0.0
        %894 = vmatpush1.msra.mxu0 0.0
        %895 = vmatprep.subr.mxu0 0.0
        %896 = vmatpush1.msra.mxu0 0.0
        %897 = vmatprep.subr.mxu0 0.0
        %898 = vmatpush1.msra.mxu0 0.0
        %899 = vmatprep.subr.mxu0 0.0
        %900 = vmatpush1.msra.mxu0 0.0
        %901 = vmatprep.mubr.f32.mxu0 0.0
        %902 = vmatmul.mubr.f32.gmra.mrb[0].mxu0 %v832
        %v903 = vpop.f32.mrb[0].mxu0
        %v904 = vadd.f32 0.0, %v903
        %v905 = vpop.f32.mrb[0].mxu0
        %906 = vmatprep.mubr.f32.mxu0 0.0
        %907 = vmatmul.mubr.f32.gmra.mrb[0].mxu0 %v835
        %v908 = vpop.f32.mrb[0].mxu0
        %v909 = vadd.f32 0.0, %v908
        %v910 = vpop.f32.mrb[0].mxu0
        %911 = vdwg.mxu0
        %v912 = vsel %vm830, %v904, -inf
        %913 = vmax.xlane.f32.xlu0 %v912
        %v914 = vpop.xlane.xlu0 %913
        %v915 = vsel %vm830, %v909, -inf
        %916 = vmax.xlane.f32.xlu0 %v915
        %v917 = vpop.xlane.xlu0 %916
        %v918 = vsub.f32 %v904, %v914
        %v919 = vsub.f32 %v909, %v917
        %v920 = vmul.f32 %v918, 1.442695
        %v921 = vpow.pop %v920
        %v922 = vmul.f32 %v919, 1.442695
        %v923 = vpow.pop %v922
        %v924 = vsel %vm830, %v921, 0.0
        %925 = vadd.xlane.f32.xlu0 %v924
        %v926 = vpop.xlane.xlu0 %925
        %v927 = vsel %vm830, %v923, 0.0
        %928 = vadd.xlane.f32.xlu0 %v927
        %v929 = vpop.xlane.xlu0 %928
        %v930 = vrcp.pop %v926
        %v931 = vrcp.pop %v929
        %v932 = vmul.f32 %v926, %v930
        %v933 = vmul.f32 %v929, %v931
        %v934 = vsub.f32 2.0, %v932
        %v935 = vsub.f32 2.0, %v933
        %v936 = vmul.f32 %v930, %v934
        %v937 = vmul.f32 %v931, %v935
        %v938 = vmul.f32 %v921, %v936
        %v939 = vmul.f32 %v923, %v937
        %v940 = vld [vmem:[#allocation3] sm:$0xff]
        %v942 = vsel %vm830, %v938, 0
        %v945 = vsel %vm830, %v939, 0
        %947 = vmatprep.subr.mxu0 0.0
        %948 = vmatpush1.msra.mxu0 %v940
        %949 = vmatprep.subr.mxu0 0.0
        %950 = vmatpush1.msra.mxu0 0.0
        %951 = vmatprep.subr.mxu0 0.0
        %952 = vmatpush1.msra.mxu0 0.0
        %953 = vmatprep.subr.mxu0 0.0
        %954 = vmatpush1.msra.mxu0 0.0
        %955 = vmatprep.subr.mxu0 0.0
        %956 = vmatpush1.msra.mxu0 0.0
        %957 = vmatprep.subr.mxu0 0.0
        %958 = vmatpush1.msra.mxu0 0.0
        %959 = vmatprep.subr.mxu0 0.0
        %960 = vmatpush1.msra.mxu0 0.0
        %961 = vmatprep.subr.mxu0 0.0
        %962 = vmatpush1.msra.mxu0 0.0
        %963 = vmatprep.subr.mxu0 0.0
        %964 = vmatpush1.msra.mxu0 0.0
        %965 = vmatprep.subr.mxu0 0.0
        %966 = vmatpush1.msra.mxu0 0.0
        %967 = vmatprep.subr.mxu0 0.0
        %968 = vmatpush1.msra.mxu0 0.0
        %969 = vmatprep.subr.mxu0 0.0
        %970 = vmatpush1.msra.mxu0 0.0
        %971 = vmatprep.subr.mxu0 0.0
        %972 = vmatpush1.msra.mxu0 0.0
        %973 = vmatprep.subr.mxu0 0.0
        %974 = vmatpush1.msra.mxu0 0.0
        %975 = vmatprep.subr.mxu0 0.0
        %976 = vmatpush1.msra.mxu0 0.0
        %977 = vmatprep.subr.mxu0 0.0
        %978 = vmatpush1.msra.mxu0 0.0
        %979 = vmatprep.subr.mxu0 0.0
        %980 = vmatpush1.msra.mxu0 0.0
        %981 = vmatprep.subr.mxu0 0.0
        %982 = vmatpush1.msra.mxu0 0.0
        %983 = vmatprep.subr.mxu0 0.0
        %984 = vmatpush1.msra.mxu0 0.0
        %985 = vmatprep.subr.mxu0 0.0
        %986 = vmatpush1.msra.mxu0 0.0
        %987 = vmatprep.subr.mxu0 0.0
        %988 = vmatpush1.msra.mxu0 0.0
        %989 = vmatprep.subr.mxu0 0.0
        %990 = vmatpush1.msra.mxu0 0.0
        %991 = vmatprep.subr.mxu0 0.0
        %992 = vmatpush1.msra.mxu0 0.0
        %993 = vmatprep.subr.mxu0 0.0
        %994 = vmatpush1.msra.mxu0 0.0
        %995 = vmatprep.subr.mxu0 0.0
        %996 = vmatpush1.msra.mxu0 0.0
        %997 = vmatprep.subr.mxu0 0.0
        %998 = vmatpush1.msra.mxu0 0.0
        %999 = vmatprep.subr.mxu0 0.0
        %1000 = vmatpush1.msra.mxu0 0.0
        %1001 = vmatprep.subr.mxu0 0.0
        %1002 = vmatpush1.msra.mxu0 0.0
        %1003 = vmatprep.subr.mxu0 0.0
        %1004 = vmatpush1.msra.mxu0 0.0
        %1005 = vmatprep.subr.mxu0 0.0
        %1006 = vmatpush1.msra.mxu0 0.0
        %1007 = vmatprep.subr.mxu0 0.0
        %1008 = vmatpush1.msra.mxu0 0.0
        %1009 = vmatprep.subr.mxu0 0.0
        %1010 = vmatpush1.msra.mxu0 0.0
        %1011 = vmatprep.mubr.f32.mxu0 0.0
        %1012 = vmatmul.mubr.f32.gmra.mrb[0].mxu0 %v942
        %v1013 = vpop.f32.mrb[0].mxu0
        %v1014 = vadd.f32 0.0, %v1013
        %v1015 = vpop.f32.mrb[0].mxu0
        %1016 = vmatprep.mubr.f32.mxu0 0.0
        %1017 = vmatmul.mubr.f32.gmra.mrb[0].mxu0 %v945
        %v1018 = vpop.f32.mrb[0].mxu0
        %v1019 = vadd.f32 0.0, %v1018
        %v1020 = vpop.f32.mrb[0].mxu0
        %1021 = vdwg.mxu0
        %1022 = vst.msk [vmem:[#allocation4] sm:$0xff] %vm830, %v1014
        %1023 = vst.msk [vmem:[#allocation4 + $0x8] sm:$0xff] %vm830, %v1019
        %s1024 = scalar_lea.vmem [#allocation2], 8
        %v1025 = vld [vmem:[%s1024] sm:$0xff]
        %1026 = vrot.lane.b32.xlu0 %v821, 120
        %v1027 = vpop.permute.xlu0 %1026
        %1028 = vrot.lane.b32.xlu0 %v826, 120
        %v1029 = vpop.permute.xlu0 %1028
        %v1030 = vsel %vm830, %v1027, 0
        %v1032 = vsel %vm830, %v1029, 0
        %1034 = vmatprep.subr.mxu0 0.0
        %1035 = vmatpush1.msra.mxu0 %v1025
        %1036 = vmatprep.subr.mxu0 0.0
        %1037 = vmatpush1.msra.mxu0 0.0
        %1038 = vmatprep.subr.mxu0 0.0
        %1039 = vmatpush1.msra.mxu0 0.0
        %1040 = vmatprep.subr.mxu0 0.0
        %1041 = vmatpush1.msra.mxu0 0.0
        %1042 = vmatprep.subr.mxu0 0.0
        %1043 = vmatpush1.msra.mxu0 0.0
        %1044 = vmatprep.subr.mxu0 0.0
        %1045 = vmatpush1.msra.mxu0 0.0
        %1046 = vmatprep.subr.mxu0 0.0
        %1047 = vmatpush1.msra.mxu0 0.0
        %1048 = vmatprep.subr.mxu0 0.0
        %1049 = vmatpush1.msra.mxu0 0.0
        %1050 = vmatprep.subr.mxu0 0.0
        %1051 = vmatpush1.msra.mxu0 0.0
        %1052 = vmatprep.subr.mxu0 0.0
        %1053 = vmatpush1.msra.mxu0 0.0
        %1054 = vmatprep.subr.mxu0 0.0
        %1055 = vmatpush1.msra.mxu0 0.0
        %1056 = vmatprep.subr.mxu0 0.0
        %1057 = vmatpush1.msra.mxu0 0.0
        %1058 = vmatprep.subr.mxu0 0.0
        %1059 = vmatpush1.msra.mxu0 0.0
        %1060 = vmatprep.subr.mxu0 0.0
        %1061 = vmatpush1.msra.mxu0 0.0
        %1062 = vmatprep.subr.mxu0 0.0
        %1063 = vmatpush1.msra.mxu0 0.0
        %1064 = vmatprep.subr.mxu0 0.0
        %1065 = vmatpush1.msra.mxu0 0.0
        %1066 = vmatprep.subr.mxu0 0.0
        %1067 = vmatpush1.msra.mxu0 0.0
        %1068 = vmatprep.subr.mxu0 0.0
        %1069 = vmatpush1.msra.mxu0 0.0
        %1070 = vmatprep.subr.mxu0 0.0
        %1071 = vmatpush1.msra.mxu0 0.0
        %1072 = vmatprep.subr.mxu0 0.0
        %1073 = vmatpush1.msra.mxu0 0.0
        %1074 = vmatprep.subr.mxu0 0.0
        %1075 = vmatpush1.msra.mxu0 0.0
        %1076 = vmatprep.subr.mxu0 0.0
        %1077 = vmatpush1.msra.mxu0 0.0
        %1078 = vmatprep.subr.mxu0 0.0
        %1079 = vmatpush1.msra.mxu0 0.0
        %1080 = vmatprep.subr.mxu0 0.0
        %1081 = vmatpush1.msra.mxu0 0.0
        %1082 = vmatprep.subr.mxu0 0.0
        %1083 = vmatpush1.msra.mxu0 0.0
        %1084 = vmatprep.subr.mxu0 0.0
        %1085 = vmatpush1.msra.mxu0 0.0
        %1086 = vmatprep.subr.mxu0 0.0
        %1087 = vmatpush1.msra.mxu0 0.0
        %1088 = vmatprep.subr.mxu0 0.0
        %1089 = vmatpush1.msra.mxu0 0.0
        %1090 = vmatprep.subr.mxu0 0.0
        %1091 = vmatpush1.msra.mxu0 0.0
        %1092 = vmatprep.subr.mxu0 0.0
        %1093 = vmatpush1.msra.mxu0 0.0
        %1094 = vmatprep.subr.mxu0 0.0
        %1095 = vmatpush1.msra.mxu0 0.0
        %1096 = vmatprep.subr.mxu0 0.0
        %1097 = vmatpush1.msra.mxu0 0.0
        %1098 = vmatprep.mubr.f32.mxu0 0.0
        %1099 = vmatmul.mubr.f32.gmra.mrb[0].mxu0 %v1030
        %v1100 = vpop.f32.mrb[0].mxu0
        %v1101 = vadd.f32 0.0, %v1100
        %v1102 = vpop.f32.mrb[0].mxu0
        %1103 = vmatprep.mubr.f32.mxu0 0.0
        %1104 = vmatmul.mubr.f32.gmra.mrb[0].mxu0 %v1032
        %v1105 = vpop.f32.mrb[0].mxu0
        %v1106 = vadd.f32 0.0, %v1105
        %v1107 = vpop.f32.mrb[0].mxu0
        %1108 = vdwg.mxu0
        %v1109 = vsel %vm830, %v1101, -inf
        %1110 = vmax.xlane.f32.xlu0 %v1109
        %v1111 = vpop.xlane.xlu0 %1110
        %v1112 = vsel %vm830, %v1106, -inf
        %1113 = vmax.xlane.f32.xlu0 %v1112
        %v1114 = vpop.xlane.xlu0 %1113
        %v1115 = vsub.f32 %v1101, %v1111
        %v1116 = vsub.f32 %v1106, %v1114
        %v1117 = vmul.f32 %v1115, 1.442695
        %v1118 = vpow.pop %v1117
        %v1119 = vmul.f32 %v1116, 1.442695
        %v1120 = vpow.pop %v1119
        %v1121 = vsel %vm830, %v1118, 0.0
        %1122 = vadd.xlane.f32.xlu0 %v1121
        %v1123 = vpop.xlane.xlu0 %1122
        %v1124 = vsel %vm830, %v1120, 0.0
        %1125 = vadd.xlane.f32.xlu0 %v1124
        %v1126 = vpop.xlane.xlu0 %1125
        %v1127 = vrcp.pop %v1123
        %v1128 = vrcp.pop %v1126
        %v1129 = vmul.f32 %v1123, %v1127
        %v1130 = vmul.f32 %v1126, %v1128
        %v1131 = vsub.f32 2.0, %v1129
        %v1132 = vsub.f32 2.0, %v1130
        %v1133 = vmul.f32 %v1127, %v1131
        %v1134 = vmul.f32 %v1128, %v1132
        %v1135 = vmul.f32 %v1118, %v1133
        %v1136 = vmul.f32 %v1120, %v1134
        %s1137 = scalar_lea.vmem [#allocation3], 8
        %v1138 = vld [vmem:[%s1137] sm:$0xff]
        %v1140 = vsel %vm830, %v1135, 0
        %v1143 = vsel %vm830, %v1136, 0
        %1145 = vmatprep.subr.mxu0 0.0
        %1146 = vmatpush1.msra.mxu0 %v1138
        %1147 = vmatprep.subr.mxu0 0.0
        %1148 = vmatpush1.msra.mxu0 0.0
        %1149 = vmatprep.subr.mxu0 0.0
        %1150 = vmatpush1.msra.mxu0 0.0
        %1151 = vmatprep.subr.mxu0 0.0
        %1152 = vmatpush1.msra.mxu0 0.0
        %1153 = vmatprep.subr.mxu0 0.0
        %1154 = vmatpush1.msra.mxu0 0.0
        %1155 = vmatprep.subr.mxu0 0.0
        %1156 = vmatpush1.msra.mxu0 0.0
        %1157 = vmatprep.subr.mxu0 0.0
        %1158 = vmatpush1.msra.mxu0 0.0
        %1159 = vmatprep.subr.mxu0 0.0
        %1160 = vmatpush1.msra.mxu0 0.0
        %1161 = vmatprep.subr.mxu0 0.0
        %1162 = vmatpush1.msra.mxu0 0.0
        %1163 = vmatprep.subr.mxu0 0.0
        %1164 = vmatpush1.msra.mxu0 0.0
        %1165 = vmatprep.subr.mxu0 0.0
        %1166 = vmatpush1.msra.mxu0 0.0
        %1167 = vmatprep.subr.mxu0 0.0
        %1168 = vmatpush1.msra.mxu0 0.0
        %1169 = vmatprep.subr.mxu0 0.0
        %1170 = vmatpush1.msra.mxu0 0.0
        %1171 = vmatprep.subr.mxu0 0.0
        %1172 = vmatpush1.msra.mxu0 0.0
        %1173 = vmatprep.subr.mxu0 0.0
        %1174 = vmatpush1.msra.mxu0 0.0
        %1175 = vmatprep.subr.mxu0 0.0
        %1176 = vmatpush1.msra.mxu0 0.0
        %1177 = vmatprep.subr.mxu0 0.0
        %1178 = vmatpush1.msra.mxu0 0.0
        %1179 = vmatprep.subr.mxu0 0.0
        %1180 = vmatpush1.msra.mxu0 0.0
        %1181 = vmatprep.subr.mxu0 0.0
        %1182 = vmatpush1.msra.mxu0 0.0
        %1183 = vmatprep.subr.mxu0 0.0
        %1184 = vmatpush1.msra.mxu0 0.0
        %1185 = vmatprep.subr.mxu0 0.0
        %1186 = vmatpush1.msra.mxu0 0.0
        %1187 = vmatprep.subr.mxu0 0.0
        %1188 = vmatpush1.msra.mxu0 0.0
        %1189 = vmatprep.subr.mxu0 0.0
        %1190 = vmatpush1.msra.mxu0 0.0
        %1191 = vmatprep.subr.mxu0 0.0
        %1192 = vmatpush1.msra.mxu0 0.0
        %1193 = vmatprep.subr.mxu0 0.0
        %1194 = vmatpush1.msra.mxu0 0.0
        %1195 = vmatprep.subr.mxu0 0.0
        %1196 = vmatpush1.msra.mxu0 0.0
        %1197 = vmatprep.subr.mxu0 0.0
        %1198 = vmatpush1.msra.mxu0 0.0
        %1199 = vmatprep.subr.mxu0 0.0
        %1200 = vmatpush1.msra.mxu0 0.0
        %1201 = vmatprep.subr.mxu0 0.0
        %1202 = vmatpush1.msra.mxu0 0.0
        %1203 = vmatprep.subr.mxu0 0.0
        %1204 = vmatpush1.msra.mxu0 0.0
        %1205 = vmatprep.subr.mxu0 0.0
        %1206 = vmatpush1.msra.mxu0 0.0
        %1207 = vmatprep.subr.mxu0 0.0
        %1208 = vmatpush1.msra.mxu0 0.0
        %1209 = vmatprep.mubr.f32.mxu0 0.0
        %1210 = vmatmul.mubr.f32.gmra.mrb[0].mxu0 %v1140
        %v1211 = vpop.f32.mrb[0].mxu0
        %v1212 = vadd.f32 0.0, %v1211
        %v1213 = vpop.f32.mrb[0].mxu0
        %1214 = vmatprep.mubr.f32.mxu0 0.0
        %1215 = vmatmul.mubr.f32.gmra.mrb[0].mxu0 %v1143
        %v1216 = vpop.f32.mrb[0].mxu0
        %v1217 = vadd.f32 0.0, %v1216
        %v1218 = vpop.f32.mrb[0].mxu0
        %1219 = vdwg.mxu0
        %1222 = vrot.lane.b32.xlu0 %v1212, 8
        %v1223 = vpop.permute.xlu0 %1222
        %1224 = vrot.lane.b32.xlu0 %v1217, 8
        %v1225 = vpop.permute.xlu0 %1224
        %vm1228 = vcmask 130112
        %1229 = vst.msk [vmem:[#allocation4] sm:$0xff] %vm1228, %v1223
        %1230 = vst.msk [vmem:[#allocation4 + $0x8] sm:$0xff] %vm1228, %v1225
        %s1231 = scalar_lea.vmem [#allocation2], 16
        %v1232 = vld [vmem:[%s1231] sm:$0xff]
        %1233 = vrot.lane.b32.xlu0 %v821, 112
        %v1234 = vpop.permute.xlu0 %1233
        %1235 = vrot.lane.b32.xlu0 %v826, 112
        %v1236 = vpop.permute.xlu0 %1235
        %v1237 = vsel %vm830, %v1234, 0
        %v1239 = vsel %vm830, %v1236, 0
        %1241 = vmatprep.subr.mxu0 0.0
        %1242 = vmatpush1.msra.mxu0 %v1232
        %1243 = vmatprep.subr.mxu0 0.0
        %1244 = vmatpush1.msra.mxu0 0.0
        %1245 = vmatprep.subr.mxu0 0.0
        %1246 = vmatpush1.msra.mxu0 0.0
        %1247 = vmatprep.subr.mxu0 0.0
        %1248 = vmatpush1.msra.mxu0 0.0
        %1249 = vmatprep.subr.mxu0 0.0
        %1250 = vmatpush1.msra.mxu0 0.0
        %1251 = vmatprep.subr.mxu0 0.0
        %1252 = vmatpush1.msra.mxu0 0.0
        %1253 = vmatprep.subr.mxu0 0.0
        %1254 = vmatpush1.msra.mxu0 0.0
        %1255 = vmatprep.subr.mxu0 0.0
        %1256 = vmatpush1.msra.mxu0 0.0
        %1257 = vmatprep.subr.mxu0 0.0
        %1258 = vmatpush1.msra.mxu0 0.0
        %1259 = vmatprep.subr.mxu0 0.0
        %1260 = vmatpush1.msra.mxu0 0.0
        %1261 = vmatprep.subr.mxu0 0.0
        %1262 = vmatpush1.msra.mxu0 0.0
        %1263 = vmatprep.subr.mxu0 0.0
        %1264 = vmatpush1.msra.mxu0 0.0
        %1265 = vmatprep.subr.mxu0 0.0
        %1266 = vmatpush1.msra.mxu0 0.0
        %1267 = vmatprep.subr.mxu0 0.0
        %1268 = vmatpush1.msra.mxu0 0.0
        %1269 = vmatprep.subr.mxu0 0.0
        %1270 = vmatpush1.msra.mxu0 0.0
        %1271 = vmatprep.subr.mxu0 0.0
        %1272 = vmatpush1.msra.mxu0 0.0
        %1273 = vmatprep.subr.mxu0 0.0
        %1274 = vmatpush1.msra.mxu0 0.0
        %1275 = vmatprep.subr.mxu0 0.0
        %1276 = vmatpush1.msra.mxu0 0.0
        %1277 = vmatprep.subr.mxu0 0.0
        %1278 = vmatpush1.msra.mxu0 0.0
        %1279 = vmatprep.subr.mxu0 0.0
        %1280 = vmatpush1.msra.mxu0 0.0
        %1281 = vmatprep.subr.mxu0 0.0
        %1282 = vmatpush1.msra.mxu0 0.0
        %1283 = vmatprep.subr.mxu0 0.0
        %1284 = vmatpush1.msra.mxu0 0.0
        %1285 = vmatprep.subr.mxu0 0.0
        %1286 = vmatpush1.msra.mxu0 0.0
        %1287 = vmatprep.subr.mxu0 0.0
        %1288 = vmatpush1.msra.mxu0 0.0
        %1289 = vmatprep.subr.mxu0 0.0
        %1290 = vmatpush1.msra.mxu0 0.0
        %1291 = vmatprep.subr.mxu0 0.0
        %1292 = vmatpush1.msra.mxu0 0.0
        %1293 = vmatprep.subr.mxu0 0.0
        %1294 = vmatpush1.msra.mxu0 0.0
        %1295 = vmatprep.subr.mxu0 0.0
        %1296 = vmatpush1.msra.mxu0 0.0
        %1297 = vmatprep.subr.mxu0 0.0
        %1298 = vmatpush1.msra.mxu0 0.0
        %1299 = vmatprep.subr.mxu0 0.0
        %1300 = vmatpush1.msra.mxu0 0.0
        %1301 = vmatprep.subr.mxu0 0.0
        %1302 = vmatpush1.msra.mxu0 0.0
        %1303 = vmatprep.subr.mxu0 0.0
        %1304 = vmatpush1.msra.mxu0 0.0
        %1305 = vmatprep.mubr.f32.mxu0 0.0
        %1306 = vmatmul.mubr.f32.gmra.mrb[0].mxu0 %v1237
        %v1307 = vpop.f32.mrb[0].mxu0
        %v1308 = vadd.f32 0.0, %v1307
        %v1309 = vpop.f32.mrb[0].mxu0
        %1310 = vmatprep.mubr.f32.mxu0 0.0
        %1311 = vmatmul.mubr.f32.gmra.mrb[0].mxu0 %v1239
        %v1312 = vpop.f32.mrb[0].mxu0
        %v1313 = vadd.f32 0.0, %v1312
        %v1314 = vpop.f32.mrb[0].mxu0
        %1315 = vdwg.mxu0
        %v1316 = vsel %vm830, %v1308, -inf
        %1317 = vmax.xlane.f32.xlu0 %v1316
        %v1318 = vpop.xlane.xlu0 %1317
        %v1319 = vsel %vm830, %v1313, -inf
        %1320 = vmax.xlane.f32.xlu0 %v1319
        %v1321 = vpop.xlane.xlu0 %1320
        %v1322 = vsub.f32 %v1308, %v1318
        %v1323 = vsub.f32 %v1313, %v1321
        %v1324 = vmul.f32 %v1322, 1.442695
        %v1325 = vpow.pop %v1324
        %v1326 = vmul.f32 %v1323, 1.442695
        %v1327 = vpow.pop %v1326
        %v1328 = vsel %vm830, %v1325, 0.0
        %1329 = vadd.xlane.f32.xlu0 %v1328
        %v1330 = vpop.xlane.xlu0 %1329
        %v1331 = vsel %vm830, %v1327, 0.0
        %1332 = vadd.xlane.f32.xlu0 %v1331
        %v1333 = vpop.xlane.xlu0 %1332
        %v1334 = vrcp.pop %v1330
        %v1335 = vrcp.pop %v1333
        %v1336 = vmul.f32 %v1330, %v1334
        %v1337 = vmul.f32 %v1333, %v1335
        %v1338 = vsub.f32 2.0, %v1336
        %v1339 = vsub.f32 2.0, %v1337
        %v1340 = vmul.f32 %v1334, %v1338
        %v1341 = vmul.f32 %v1335, %v1339
        %v1342 = vmul.f32 %v1325, %v1340
        %v1343 = vmul.f32 %v1327, %v1341
        %s1344 = scalar_lea.vmem [#allocation3], 16
        %v1345 = vld [vmem:[%s1344] sm:$0xff]
        %v1347 = vsel %vm830, %v1342, 0
        %v1350 = vsel %vm830, %v1343, 0
        %1352 = vmatprep.subr.mxu0 0.0
        %1353 = vmatpush1.msra.mxu0 %v1345
        %1354 = vmatprep.subr.mxu0 0.0
        %1355 = vmatpush1.msra.mxu0 0.0
        %1356 = vmatprep.subr.mxu0 0.0
        %1357 = vmatpush1.msra.mxu0 0.0
        %1358 = vmatprep.subr.mxu0 0.0
        %1359 = vmatpush1.msra.mxu0 0.0
        %1360 = vmatprep.subr.mxu0 0.0
        %1361 = vmatpush1.msra.mxu0 0.0
        %1362 = vmatprep.subr.mxu0 0.0
        %1363 = vmatpush1.msra.mxu0 0.0
        %1364 = vmatprep.subr.mxu0 0.0
        %1365 = vmatpush1.msra.mxu0 0.0
        %1366 = vmatprep.subr.mxu0 0.0
        %1367 = vmatpush1.msra.mxu0 0.0
        %1368 = vmatprep.subr.mxu0 0.0
        %1369 = vmatpush1.msra.mxu0 0.0
        %1370 = vmatprep.subr.mxu0 0.0
        %1371 = vmatpush1.msra.mxu0 0.0
        %1372 = vmatprep.subr.mxu0 0.0
        %1373 = vmatpush1.msra.mxu0 0.0
        %1374 = vmatprep.subr.mxu0 0.0
        %1375 = vmatpush1.msra.mxu0 0.0
        %1376 = vmatprep.subr.mxu0 0.0
        %1377 = vmatpush1.msra.mxu0 0.0
        %1378 = vmatprep.subr.mxu0 0.0
        %1379 = vmatpush1.msra.mxu0 0.0
        %1380 = vmatprep.subr.mxu0 0.0
        %1381 = vmatpush1.msra.mxu0 0.0
        %1382 = vmatprep.subr.mxu0 0.0
        %1383 = vmatpush1.msra.mxu0 0.0
        %1384 = vmatprep.subr.mxu0 0.0
        %1385 = vmatpush1.msra.mxu0 0.0
        %1386 = vmatprep.subr.mxu0 0.0
        %1387 = vmatpush1.msra.mxu0 0.0
        %1388 = vmatprep.subr.mxu0 0.0
        %1389 = vmatpush1.msra.mxu0 0.0
        %1390 = vmatprep.subr.mxu0 0.0
        %1391 = vmatpush1.msra.mxu0 0.0
        %1392 = vmatprep.subr.mxu0 0.0
        %1393 = vmatpush1.msra.mxu0 0.0
        %1394 = vmatprep.subr.mxu0 0.0
        %1395 = vmatpush1.msra.mxu0 0.0
        %1396 = vmatprep.subr.mxu0 0.0
        %1397 = vmatpush1.msra.mxu0 0.0
        %1398 = vmatprep.subr.mxu0 0.0
        %1399 = vmatpush1.msra.mxu0 0.0
        %1400 = vmatprep.subr.mxu0 0.0
        %1401 = vmatpush1.msra.mxu0 0.0
        %1402 = vmatprep.subr.mxu0 0.0
        %1403 = vmatpush1.msra.mxu0 0.0
        %1404 = vmatprep.subr.mxu0 0.0
        %1405 = vmatpush1.msra.mxu0 0.0
        %1406 = vmatprep.subr.mxu0 0.0
        %1407 = vmatpush1.msra.mxu0 0.0
        %1408 = vmatprep.subr.mxu0 0.0
        %1409 = vmatpush1.msra.mxu0 0.0
        %1410 = vmatprep.subr.mxu0 0.0
        %1411 = vmatpush1.msra.mxu0 0.0
        %1412 = vmatprep.subr.mxu0 0.0
        %1413 = vmatpush1.msra.mxu0 0.0
        %1414 = vmatprep.subr.mxu0 0.0
        %1415 = vmatpush1.msra.mxu0 0.0
        %1416 = vmatprep.mubr.f32.mxu0 0.0
        %1417 = vmatmul.mubr.f32.gmra.mrb[0].mxu0 %v1347
        %v1418 = vpop.f32.mrb[0].mxu0
        %v1419 = vadd.f32 0.0, %v1418
        %v1420 = vpop.f32.mrb[0].mxu0
        %1421 = vmatprep.mubr.f32.mxu0 0.0
        %1422 = vmatmul.mubr.f32.gmra.mrb[0].mxu0 %v1350
        %v1423 = vpop.f32.mrb[0].mxu0
        %v1424 = vadd.f32 0.0, %v1423
        %v1425 = vpop.f32.mrb[0].mxu0
        %1426 = vdwg.mxu0
        %1429 = vrot.lane.b32.xlu0 %v1419, 16
        %v1430 = vpop.permute.xlu0 %1429
        %1431 = vrot.lane.b32.xlu0 %v1424, 16
        %v1432 = vpop.permute.xlu0 %1431
        %vm1435 = vcmask 195712
        %1436 = vst.msk [vmem:[#allocation4] sm:$0xff] %vm1435, %v1430
        %1437 = vst.msk [vmem:[#allocation4 + $0x8] sm:$0xff] %vm1435, %v1432
        %s1438 = scalar_lea.vmem [#allocation2], 24
        %v1439 = vld [vmem:[%s1438] sm:$0xff]
        %1440 = vrot.lane.b32.xlu0 %v821, 104
        %v1441 = vpop.permute.xlu0 %1440
        %1442 = vrot.lane.b32.xlu0 %v826, 104
        %v1443 = vpop.permute.xlu0 %1442
        %v1444 = vsel %vm830, %v1441, 0
        %v1446 = vsel %vm830, %v1443, 0
        %1448 = vmatprep.subr.mxu0 0.0
        %1449 = vmatpush1.msra.mxu0 %v1439
        %1450 = vmatprep.subr.mxu0 0.0
        %1451 = vmatpush1.msra.mxu0 0.0
        %1452 = vmatprep.subr.mxu0 0.0
        %1453 = vmatpush1.msra.mxu0 0.0
        %1454 = vmatprep.subr.mxu0 0.0
        %1455 = vmatpush1.msra.mxu0 0.0
        %1456 = vmatprep.subr.mxu0 0.0
        %1457 = vmatpush1.msra.mxu0 0.0
        %1458 = vmatprep.subr.mxu0 0.0
        %1459 = vmatpush1.msra.mxu0 0.0
        %1460 = vmatprep.subr.mxu0 0.0
        %1461 = vmatpush1.msra.mxu0 0.0
        %1462 = vmatprep.subr.mxu0 0.0
        %1463 = vmatpush1.msra.mxu0 0.0
        %1464 = vmatprep.subr.mxu0 0.0
        %1465 = vmatpush1.msra.mxu0 0.0
        %1466 = vmatprep.subr.mxu0 0.0
        %1467 = vmatpush1.msra.mxu0 0.0
        %1468 = vmatprep.subr.mxu0 0.0
        %1469 = vmatpush1.msra.mxu0 0.0
        %1470 = vmatprep.subr.mxu0 0.0
        %1471 = vmatpush1.msra.mxu0 0.0
        %1472 = vmatprep.subr.mxu0 0.0
        %1473 = vmatpush1.msra.mxu0 0.0
        %1474 = vmatprep.subr.mxu0 0.0
        %1475 = vmatpush1.msra.mxu0 0.0
        %1476 = vmatprep.subr.mxu0 0.0
        %1477 = vmatpush1.msra.mxu0 0.0
        %1478 = vmatprep.subr.mxu0 0.0
        %1479 = vmatpush1.msra.mxu0 0.0
        %1480 = vmatprep.subr.mxu0 0.0
        %1481 = vmatpush1.msra.mxu0 0.0
        %1482 = vmatprep.subr.mxu0 0.0
        %1483 = vmatpush1.msra.mxu0 0.0
        %1484 = vmatprep.subr.mxu0 0.0
        %1485 = vmatpush1.msra.mxu0 0.0
        %1486 = vmatprep.subr.mxu0 0.0
        %1487 = vmatpush1.msra.mxu0 0.0
        %1488 = vmatprep.subr.mxu0 0.0
        %1489 = vmatpush1.msra.mxu0 0.0
        %1490 = vmatprep.subr.mxu0 0.0
        %1491 = vmatpush1.msra.mxu0 0.0
        %1492 = vmatprep.subr.mxu0 0.0
        %1493 = vmatpush1.msra.mxu0 0.0
        %1494 = vmatprep.subr.mxu0 0.0
        %1495 = vmatpush1.msra.mxu0 0.0
        %1496 = vmatprep.subr.mxu0 0.0
        %1497 = vmatpush1.msra.mxu0 0.0
        %1498 = vmatprep.subr.mxu0 0.0
        %1499 = vmatpush1.msra.mxu0 0.0
        %1500 = vmatprep.subr.mxu0 0.0
        %1501 = vmatpush1.msra.mxu0 0.0
        %1502 = vmatprep.subr.mxu0 0.0
        %1503 = vmatpush1.msra.mxu0 0.0
        %1504 = vmatprep.subr.mxu0 0.0
        %1505 = vmatpush1.msra.mxu0 0.0
        %1506 = vmatprep.subr.mxu0 0.0
        %1507 = vmatpush1.msra.mxu0 0.0
        %1508 = vmatprep.subr.mxu0 0.0
        %1509 = vmatpush1.msra.mxu0 0.0
        %1510 = vmatprep.subr.mxu0 0.0
        %1511 = vmatpush1.msra.mxu0 0.0
        %1512 = vmatprep.mubr.f32.mxu0 0.0
        %1513 = vmatmul.mubr.f32.gmra.mrb[0].mxu0 %v1444
        %v1514 = vpop.f32.mrb[0].mxu0
        %v1515 = vadd.f32 0.0, %v1514
        %v1516 = vpop.f32.mrb[0].mxu0
        %1517 = vmatprep.mubr.f32.mxu0 0.0
        %1518 = vmatmul.mubr.f32.gmra.mrb[0].mxu0 %v1446
        %v1519 = vpop.f32.mrb[0].mxu0
        %v1520 = vadd.f32 0.0, %v1519
        %v1521 = vpop.f32.mrb[0].mxu0
        %1522 = vdwg.mxu0
        %v1523 = vsel %vm830, %v1515, -inf
        %1524 = vmax.xlane.f32.xlu0 %v1523
        %v1525 = vpop.xlane.xlu0 %1524
        %v1526 = vsel %vm830, %v1520, -inf
        %1527 = vmax.xlane.f32.xlu0 %v1526
        %v1528 = vpop.xlane.xlu0 %1527
        %v1529 = vsub.f32 %v1515, %v1525
        %v1530 = vsub.f32 %v1520, %v1528
        %v1531 = vmul.f32 %v1529, 1.442695
        %v1532 = vpow.pop %v1531
        %v1533 = vmul.f32 %v1530, 1.442695
        %v1534 = vpow.pop %v1533
        %v1535 = vsel %vm830, %v1532, 0.0
        %1536 = vadd.xlane.f32.xlu0 %v1535
        %v1537 = vpop.xlane.xlu0 %1536
        %v1538 = vsel %vm830, %v1534, 0.0
        %1539 = vadd.xlane.f32.xlu0 %v1538
        %v1540 = vpop.xlane.xlu0 %1539
        %v1541 = vrcp.pop %v1537
        %v1542 = vrcp.pop %v1540
        %v1543 = vmul.f32 %v1537, %v1541
        %v1544 = vmul.f32 %v1540, %v1542
        %v1545 = vsub.f32 2.0, %v1543
        %v1546 = vsub.f32 2.0, %v1544
        %v1547 = vmul.f32 %v1541, %v1545
        %v1548 = vmul.f32 %v1542, %v1546
        %v1549 = vmul.f32 %v1532, %v1547
        %v1550 = vmul.f32 %v1534, %v1548
        %s1551 = scalar_lea.vmem [#allocation3], 24
        %v1552 = vld [vmem:[%s1551] sm:$0xff]
        %v1554 = vsel %vm830, %v1549, 0
        %v1557 = vsel %vm830, %v1550, 0
        %1559 = vmatprep.subr.mxu0 0.0
        %1560 = vmatpush1.msra.mxu0 %v1552
        %1561 = vmatprep.subr.mxu0 0.0
        %1562 = vmatpush1.msra.mxu0 0.0
        %1563 = vmatprep.subr.mxu0 0.0
        %1564 = vmatpush1.msra.mxu0 0.0
        %1565 = vmatprep.subr.mxu0 0.0
        %1566 = vmatpush1.msra.mxu0 0.0
        %1567 = vmatprep.subr.mxu0 0.0
        %1568 = vmatpush1.msra.mxu0 0.0
        %1569 = vmatprep.subr.mxu0 0.0
        %1570 = vmatpush1.msra.mxu0 0.0
        %1571 = vmatprep.subr.mxu0 0.0
        %1572 = vmatpush1.msra.mxu0 0.0
        %1573 = vmatprep.subr.mxu0 0.0
        %1574 = vmatpush1.msra.mxu0 0.0
        %1575 = vmatprep.subr.mxu0 0.0
        %1576 = vmatpush1.msra.mxu0 0.0
        %1577 = vmatprep.subr.mxu0 0.0
        %1578 = vmatpush1.msra.mxu0 0.0
        %1579 = vmatprep.subr.mxu0 0.0
        %1580 = vmatpush1.msra.mxu0 0.0
        %1581 = vmatprep.subr.mxu0 0.0
        %1582 = vmatpush1.msra.mxu0 0.0
        %1583 = vmatprep.subr.mxu0 0.0
        %1584 = vmatpush1.msra.mxu0 0.0
        %1585 = vmatprep.subr.mxu0 0.0
        %1586 = vmatpush1.msra.mxu0 0.0
        %1587 = vmatprep.subr.mxu0 0.0
        %1588 = vmatpush1.msra.mxu0 0.0
        %1589 = vmatprep.subr.mxu0 0.0
        %1590 = vmatpush1.msra.mxu0 0.0
        %1591 = vmatprep.subr.mxu0 0.0
        %1592 = vmatpush1.msra.mxu0 0.0
        %1593 = vmatprep.subr.mxu0 0.0
        %1594 = vmatpush1.msra.mxu0 0.0
        %1595 = vmatprep.subr.mxu0 0.0
        %1596 = vmatpush1.msra.mxu0 0.0
        %1597 = vmatprep.subr.mxu0 0.0
        %1598 = vmatpush1.msra.mxu0 0.0
        %1599 = vmatprep.subr.mxu0 0.0
        %1600 = vmatpush1.msra.mxu0 0.0
        %1601 = vmatprep.subr.mxu0 0.0
        %1602 = vmatpush1.msra.mxu0 0.0
        %1603 = vmatprep.subr.mxu0 0.0
        %1604 = vmatpush1.msra.mxu0 0.0
        %1605 = vmatprep.subr.mxu0 0.0
        %1606 = vmatpush1.msra.mxu0 0.0
        %1607 = vmatprep.subr.mxu0 0.0
        %1608 = vmatpush1.msra.mxu0 0.0
        %1609 = vmatprep.subr.mxu0 0.0
        %1610 = vmatpush1.msra.mxu0 0.0
        %1611 = vmatprep.subr.mxu0 0.0
        %1612 = vmatpush1.msra.mxu0 0.0
        %1613 = vmatprep.subr.mxu0 0.0
        %1614 = vmatpush1.msra.mxu0 0.0
        %1615 = vmatprep.subr.mxu0 0.0
        %1616 = vmatpush1.msra.mxu0 0.0
        %1617 = vmatprep.subr.mxu0 0.0
        %1618 = vmatpush1.msra.mxu0 0.0
        %1619 = vmatprep.subr.mxu0 0.0
        %1620 = vmatpush1.msra.mxu0 0.0
        %1621 = vmatprep.subr.mxu0 0.0
        %1622 = vmatpush1.msra.mxu0 0.0
        %1623 = vmatprep.mubr.f32.mxu0 0.0
        %1624 = vmatmul.mubr.f32.gmra.mrb[0].mxu0 %v1554
        %v1625 = vpop.f32.mrb[0].mxu0
        %v1626 = vadd.f32 0.0, %v1625
        %v1627 = vpop.f32.mrb[0].mxu0
        %1628 = vmatprep.mubr.f32.mxu0 0.0
        %1629 = vmatmul.mubr.f32.gmra.mrb[0].mxu0 %v1557
        %v1630 = vpop.f32.mrb[0].mxu0
        %v1631 = vadd.f32 0.0, %v1630
        %v1632 = vpop.f32.mrb[0].mxu0
        %1633 = vdwg.mxu0
        %1636 = vrot.lane.b32.xlu0 %v1626, 24
        %v1637 = vpop.permute.xlu0 %1636
        %1638 = vrot.lane.b32.xlu0 %v1631, 24
        %v1639 = vpop.permute.xlu0 %1638
        %vm1642 = vcmask 261312
        %1643 = vst.msk [vmem:[#allocation4] sm:$0xff] %vm1642, %v1637
        %1644 = vst.msk [vmem:[#allocation4 + $0x8] sm:$0xff] %vm1642, %v1639
        %v1645 = vld [vmem:[#allocation4] sm:$0xff]
        %v1646 = vld [vmem:[#allocation4 + $0x8] sm:$0xff]
        %v1647 = vld [vmem:[#allocation13] sm:$0xff]
        %v1648 = vld [vmem:[#allocation13 + $0x8] sm:$0xff]
        %v1649 = vld [vmem:[#allocation13 + $0x10] sm:$0xff]
        %v1650 = vld [vmem:[#allocation13 + $0x18] sm:$0xff]
        %v1652 = vsel %vm747, %v1645, 0
        %v1655 = vsel %vm747, %v1646, 0
        %1657 = vmatprep.subr.mxu0 0.0
        %1658 = vmatpush1.msra.mxu0 %v1647
        %1659 = vmatprep.subr.mxu0 0.0
        %1660 = vmatpush1.msra.mxu0 %v1648
        %1661 = vmatprep.subr.mxu0 0.0
        %1662 = vmatpush1.msra.mxu0 %v1649
        %1663 = vmatprep.subr.mxu0 0.0
        %1664 = vmatpush1.msra.mxu0 %v1650
        %1665 = vmatprep.subr.mxu0 0.0
        %1666 = vmatpush1.msra.mxu0 0.0
        %1667 = vmatprep.subr.mxu0 0.0
        %1668 = vmatpush1.msra.mxu0 0.0
        %1669 = vmatprep.subr.mxu0 0.0
        %1670 = vmatpush1.msra.mxu0 0.0
        %1671 = vmatprep.subr.mxu0 0.0
        %1672 = vmatpush1.msra.mxu0 0.0
        %1673 = vmatprep.subr.mxu0 0.0
        %1674 = vmatpush1.msra.mxu0 0.0
        %1675 = vmatprep.subr.mxu0 0.0
        %1676 = vmatpush1.msra.mxu0 0.0
        %1677 = vmatprep.subr.mxu0 0.0
        %1678 = vmatpush1.msra.mxu0 0.0
        %1679 = vmatprep.subr.mxu0 0.0
        %1680 = vmatpush1.msra.mxu0 0.0
        %1681 = vmatprep.subr.mxu0 0.0
        %1682 = vmatpush1.msra.mxu0 0.0
        %1683 = vmatprep.subr.mxu0 0.0
        %1684 = vmatpush1.msra.mxu0 0.0
        %1685 = vmatprep.subr.mxu0 0.0
        %1686 = vmatpush1.msra.mxu0 0.0
        %1687 = vmatprep.subr.mxu0 0.0
        %1688 = vmatpush1.msra.mxu0 0.0
        %1689 = vmatprep.subr.mxu0 0.0
        %1690 = vmatpush1.msra.mxu0 0.0
        %1691 = vmatprep.subr.mxu0 0.0
        %1692 = vmatpush1.msra.mxu0 0.0
        %1693 = vmatprep.subr.mxu0 0.0
        %1694 = vmatpush1.msra.mxu0 0.0
        %1695 = vmatprep.subr.mxu0 0.0
        %1696 = vmatpush1.msra.mxu0 0.0
        %1697 = vmatprep.subr.mxu0 0.0
        %1698 = vmatpush1.msra.mxu0 0.0
        %1699 = vmatprep.subr.mxu0 0.0
        %1700 = vmatpush1.msra.mxu0 0.0
        %1701 = vmatprep.subr.mxu0 0.0
        %1702 = vmatpush1.msra.mxu0 0.0
        %1703 = vmatprep.subr.mxu0 0.0
        %1704 = vmatpush1.msra.mxu0 0.0
        %1705 = vmatprep.subr.mxu0 0.0
        %1706 = vmatpush1.msra.mxu0 0.0
        %1707 = vmatprep.subr.mxu0 0.0
        %1708 = vmatpush1.msra.mxu0 0.0
        %1709 = vmatprep.subr.mxu0 0.0
        %1710 = vmatpush1.msra.mxu0 0.0
        %1711 = vmatprep.subr.mxu0 0.0
        %1712 = vmatpush1.msra.mxu0 0.0
        %1713 = vmatprep.subr.mxu0 0.0
        %1714 = vmatpush1.msra.mxu0 0.0
        %1715 = vmatprep.subr.mxu0 0.0
        %1716 = vmatpush1.msra.mxu0 0.0
        %1717 = vmatprep.subr.mxu0 0.0
        %1718 = vmatpush1.msra.mxu0 0.0
        %1719 = vmatprep.subr.mxu0 0.0
        %1720 = vmatpush1.msra.mxu0 0.0
        %1721 = vmatprep.mubr.f32.mxu0 0.0
        %1722 = vmatmul.mubr.f32.gmra.mrb[0].mxu0 %v1652
        %v1723 = vpop.f32.mrb[0].mxu0
        %v1724 = vadd.f32 0.0, %v1723
        %v1725 = vpop.f32.mrb[0].mxu0
        %1726 = vmatprep.mubr.f32.mxu0 0.0
        %1727 = vmatmul.mubr.f32.gmra.mrb[0].mxu0 %v1655
        %v1728 = vpop.f32.mrb[0].mxu0
        %v1729 = vadd.f32 0.0, %v1728
        %v1730 = vpop.f32.mrb[0].mxu0
        %1731 = vdwg.mxu0
        %1732 = vst.msk [vmem:[%s341] sm:$0xff] %vm747, %v1724
        %1733 = vst.msk [vmem:[%s341 + $0x8] sm:$0xff] %vm747, %v1729
        %s1734 = sand.u32 %s178, 1
        %s1735 = scalar_lea.sflag [#allocation7], %s1734
        %s1736 = sand.u32 %s178, 1
        %s1737 = smul.addr %s1736, 16
        %s1738 = scalar_lea.vmem [#allocation14], %s1737
        // Predicated region
        $region69: #{tpu_custom_call.1} parent=43 // pred_check
          %p1739 = pneg %p188
        $region70: #{tpu_custom_call.1} parent=43 // pred_check_branch
          %1741 = sbr.rel (%p1739) target = $region72
        $region71: #{tpu_custom_call.1} parent=43 // pred_region
          %s1742 = smul.u32 2, %s30
          %s1744 = ssub.s32 256, 256
          %1745 = vsyncadd %s1735, %s1744
          %s1746 = smul.addr %s29, 2
          %s1747 = sadd.s32 %s1742, %s1746
          %s1748 = smul.addr %s1747, 128
          %s1749 = scalar_lea.hbm %s6, %s1748
          %s1750 = sshll.u32 %s1738, 4
          %s1751 = int_to_ptr.vmem [resolvable:$true] %s1750
          %1756 = dma.vmem_to_hbm [thread:$0]  %s1751, 256, %s1749, %s1735, 128, 128, 8
        $region72: #{tpu_custom_call.1} parent=43 // pred_fallthru
          _
      $region44: #{tpu_custom_call.1} parent=5 // pred_fallthru
        _
      %p1757 = scmp.le.s32.totalorder 2, %s20
      // Predicated region
      $region73: #{tpu_custom_call.1} parent=5 // pred_check
        %p1758 = pneg %p1757
      $region74: #{tpu_custom_call.1} parent=5 // pred_check_branch
        %1760 = sbr.rel (%p1758) target = $region76
      $region75: #{tpu_custom_call.1} parent=5 // pred_region
        %s1761 = ssub.s32 %s20, 2
        // Predicated region
        $region77: #{tpu_custom_call.1} parent=75 // pred_check
          %p1762 = pneg %p194
        $region78: #{tpu_custom_call.1} parent=75 // pred_check_branch
          %1764 = sbr.rel (%p1762) target = $region80
        $region79: #{tpu_custom_call.1} parent=75 // pred_region
          %s1765 = sand.u32 %s179, 1
          %s1766 = scalar_lea.sflag [#allocation7], %s1765
          %s1767 = sand.u32 %s179, 1
          %s1768 = smul.addr %s1767, 16
          %s1769 = scalar_lea.vmem [#allocation14], %s1768
          %1770 = dma.done %s1766, 256
        $region80: #{tpu_custom_call.1} parent=75 // pred_fallthru
          _
      $region76: #{tpu_custom_call.1} parent=5 // pred_fallthru
        _
    $region6: #{tpu_custom_call.1} parent=1 // loop_footer
      %s24 = sadd.s32 1, %s20
    $region7: #{tpu_custom_call.1} parent=1 // loop_footer_branch
      %19 = sbr.rel target = $region3
    $region8: #{tpu_custom_call.1} parent=1 // loop_exit
      _
    %1771 = vsyncpa [#allocation6], 1
    %s1772 = scalar_lea.sflag [#allocation6], 1
    %1773 = vsyncpa %s1772, 1
    %1774 = vsyncpa [#allocation9], 1
    %1775 = vsyncpa [#allocation12], 1
    %1776 = vsyncpa [#allocation7], 1
    %s1777 = scalar_lea.sflag [#allocation7], 1
    %1778 = vsyncpa %s1777, 1

</llo_original>
